<compile_context>
chip_gen: v6e
topology: v6e:2x2x1
jax: 0.10.0
libtpu: 0.0.40
codegen_flags: <defaults>
</compile_context>

<pallas_src>
import jax
import jax.numpy as jnp
from jax.experimental import pallas as pl
from jax.experimental.pallas import tpu as pltpu


# ----------------------------------------------------------------------------
# Kernel: unrolled VPU broadcast-FMA over channels + per-batch CFG bias
# ----------------------------------------------------------------------------
def _make_cfg_kernel(C, Cout):
    """out[o, :, :] = sum_k w[o,k]*z[k] + w[o,C+k]*cc_c[k] + w[o,2C+k]*cc_u[k] + bias[n,o]."""
    # TODO(synk): for production UNet channel widths (C >= ~64) switch this
    # unrolled VPU-FMA path to an MXU dot path (unroll size grows as Cout*3C).
    def kernel(w_ref, bias_ref, z_ref, cc_c_ref, cc_u_ref, o_ref):
        n = pl.program_id(0)
        for o in range(Cout):
            # z term (coefficient collapses to exactly 1 across the 3 branches)
            acc = z_ref[0, 0] * w_ref[o, 0]
            for k in range(1, C):
                acc = acc + z_ref[0, k] * w_ref[o, k]
            # image-conditioning terms, image-CFG scale pre-folded into w
            for k in range(C):
                acc = acc + cc_c_ref[0, k] * w_ref[o, C + k]
            for k in range(C):
                acc = acc + cc_u_ref[0, k] * w_ref[o, 2 * C + k]
            o_ref[0, o] = (acc + bias_ref[n, o]).astype(o_ref.dtype)

    return kernel


# ----------------------------------------------------------------------------
# Tile selection: biggest (8,128)-aligned tile under the VMEM budget
# ----------------------------------------------------------------------------
def _pick_hw_tile(HW, C, Cout, budget_bytes):
    per_elem = 2 * (3 * C + Cout) * 4       # double-buffered f32 bytes / spatial element
    max_thw = max(128, budget_bytes // per_elem)
    if HW <= max_thw:
        return HW                            # full per-batch slab (largest possible tile)
    step = 1024                              # keeps s_tile (= thw//128) a multiple of 8
    t = (max_thw // step) * step
    while t >= step:
        if HW % t == 0:
            return t
        t -= step
    return HW                                # fallback: single full-slab tile per batch


# ----------------------------------------------------------------------------
# Wrapper reproducing CFGDenoiser.forward
# ----------------------------------------------------------------------------
def cfg_denoiser_forward(z, sigma, cond, uncond, text_cfg_scale,
                         image_cfg_scale, params, *,
                         hw_tile=None, vmem_budget_bytes=12 << 20):
    N, C, H, W = z.shape
    HW = H * W
    Cout = params["w"].shape[1]
    assert HW % 128 == 0, "spatial extent H*W must be a multiple of 128"

    # Dense lane-aligned layout: [N, C, HW] -> [N, C, HW//128, 128] (pure reshape).
    z4    = z.reshape(N, C, HW // 128, 128)
    cc_c4 = cond["c_concat"][0].reshape(N, C, HW // 128, 128)
    cc_u4 = uncond["c_concat"][0].reshape(N, C, HW // 128, 128)

    t = jnp.float32(text_cfg_scale)
    i = jnp.float32(image_cfg_scale)

    # Split the channel-concat 1x1-conv weight and fold the image-CFG blend
    # into prescaled weight columns (exact because the inner model is linear):
    #   out = Wz@z + (i*Wc)@cc_cond + ((1-i)*Wc)@cc_uncond + bias_cfg
    w = params["w"].astype(jnp.float32)                 # (2C, Cout)
    wz_t = jnp.transpose(w[:C])                         # (Cout, C)
    wc_t = jnp.transpose(w[C:])                         # (Cout, C)
    w_all = jnp.concatenate([wz_t, i * wc_t, (1.0 - i) * wc_t], axis=1)  # (Cout, 3C)

    # Hoisted per-batch conditioning (text crossattn emb + sigma + conv bias),
    # CFG-weighted into one tiny bias (N, Cout); lives in SMEM.
    txt_c = jnp.mean(cond["c_crossattn"][0], axis=1) @ params["w_txt"]    # (N, Cout)
    txt_u = jnp.mean(uncond["c_crossattn"][0], axis=1) @ params["w_txt"]  # (N, Cout)
    sig   = sigma[:, None] * params["w_sigma"]                            # (N, Cout)
    bias_c  = params["b"] + txt_c + sig     # branch: cond      (cond crossattn)
    bias_ic = params["b"] + txt_u + sig     # branch: img-cond  (uncond crossattn)
    bias_u  = params["b"] + txt_u + sig     # branch: uncond    (uncond crossattn)
    bias_cfg = ((1.0 - i) * bias_u + t * bias_c + (i - t) * bias_ic).astype(jnp.float32)

    # Spatial tiling: largest tile fitting the (generation-safe) VMEM budget.
    if hw_tile is None:
        hw_tile = _pick_hw_tile(HW, C, Cout, vmem_budget_bytes)
    thw = min(hw_tile, HW)
    assert HW % thw == 0 and thw % 128 == 0, \
        "hw_tile must divide H*W and be a multiple of 128"
    n_hw = HW // thw
    # Keep >= 2 grid cells when possible so v7x can shard across both TensorCores.
    if N == 1 and n_hw == 1 and HW % 2048 == 0:
        thw //= 2
        n_hw = 2
    s_tile = thw // 128
    grid = (N, n_hw)          # batch outer -> SMEM weights/bias loaded once

    kernel = _make_cfg_kernel(C, Cout)
    out4 = pl.pallas_call(
        kernel,
        out_shape=jax.ShapeDtypeStruct((N, Cout, HW // 128, 128), jnp.float32),
        grid=grid,
        in_specs=[
            pl.BlockSpec(memory_space=pltpu.MemorySpace.SMEM),           # w_all  (Cout, 3C)
            pl.BlockSpec(memory_space=pltpu.MemorySpace.SMEM),           # bias   (N, Cout)
            pl.BlockSpec((1, C, s_tile, 128), lambda n, h: (n, 0, h, 0)),  # z
            pl.BlockSpec((1, C, s_tile, 128), lambda n, h: (n, 0, h, 0)),  # cond c_concat
            pl.BlockSpec((1, C, s_tile, 128), lambda n, h: (n, 0, h, 0)),  # uncond c_concat
        ],
        out_specs=pl.BlockSpec((1, Cout, s_tile, 128), lambda n, h: (n, 0, h, 0)),
        compiler_params=pltpu.CompilerParams(
            dimension_semantics=("parallel", "parallel")),
    )(w_all, bias_cfg, z4, cc_c4, cc_u4)

    return out4.reshape(N, Cout, H, W)


# ----------------------------------------------------------------------------
# Pure-JAX reference: faithful 3-branch CFGDenoiser.forward (for correctness)
# ----------------------------------------------------------------------------
def _inner_model_ref(x_cat, sigma, crossattn, params):
    """Synthetic conditioned 1x1-conv denoiser.  x_cat: [B, 2C, H, W]."""
    y = jnp.einsum("bkhw,kc->bchw", x_cat, params["w"])
    txt = jnp.mean(crossattn, axis=1) @ params["w_txt"]               # [B, Cout]
    return (y
            + params["b"][0][None, :, None, None]
            + txt[:, :, None, None]
            + sigma[:, None, None, None] * params["w_sigma"][0][None, :, None, None])


def _cfg_denoiser_ref(z, sigma, cond, uncond, text_cfg_scale,
                      image_cfg_scale, params):
    N = z.shape[0]
    cfg_z = jnp.concatenate([z, z, z], axis=0)
    cfg_sigma = jnp.concatenate([sigma, sigma, sigma], axis=0)
    cfg_ca = jnp.concatenate([cond["c_crossattn"][0], uncond["c_crossattn"][0],
                              uncond["c_crossattn"][0]], axis=0)
    cfg_cc = jnp.concatenate([cond["c_concat"][0], cond["c_concat"][0],
                              uncond["c_concat"][0]], axis=0)
    x_cat = jnp.concatenate([cfg_z, cfg_cc], axis=1)
    out = _inner_model_ref(x_cat, cfg_sigma, cfg_ca, params)
    oc, oic, ou = out[:N], out[N:2 * N], out[2 * N:]
    return ou + text_cfg_scale * (oc - oic) + image_cfg_scale * (oic - ou)


if __name__ == "__main__":
    # Small shapes consistent with the forward: latents NCHW, text tokens.
    N, C, H, W = 2, 4, 16, 16
    S, D = 8, 32          # crossattn seq len / hidden
    Cin, Cout = 2 * C, C  # z (+ c_concat) channels -> latent channels

    key = jax.random.PRNGKey(0)
    kz, ksig, kca_c, kca_u, kcc_c, kcc_u, kw, kb, kwt, kws = jax.random.split(key, 10)

    z = jax.random.normal(kz, (N, C, H, W), dtype=jnp.float32)
    sigma = jax.random.uniform(ksig, (N,), dtype=jnp.float32, minval=0.1, maxval=1.0)
    cond = {
        "c_crossattn": [jax.random.normal(kca_c, (N, S, D), dtype=jnp.float32)],
        "c_concat": [jax.random.normal(kcc_c, (N, C, H, W), dtype=jnp.float32)],
    }
    uncond = {
        "c_crossattn": [jax.random.normal(kca_u, (N, S, D), dtype=jnp.float32)],
        "c_concat": [jax.random.normal(kcc_u, (N, C, H, W), dtype=jnp.float32)],
    }
    text_cfg_scale = 7.5
    image_cfg_scale = 1.5

    # Deterministic synthetic inner-model parameters.
    params = {
        "w": jax.random.normal(kw, (Cin, Cout), dtype=jnp.float32) * 0.1,
        "b": jax.random.normal(kb, (1, Cout), dtype=jnp.float32) * 0.01,
        "w_txt": jax.random.normal(kwt, (D, Cout), dtype=jnp.float32) * 0.1,
        "w_sigma": jax.random.normal(kws, (1, Cout), dtype=jnp.float32) * 0.1,
    }

    out = cfg_denoiser_forward(z, sigma, cond, uncond,
                               text_cfg_scale, image_cfg_scale, params)
    out = jax.block_until_ready(out)

    ref = _cfg_denoiser_ref(z, sigma, cond, uncond,
                            text_cfg_scale, image_cfg_scale, params)
    assert out.shape == (N, C, H, W)
    assert jnp.allclose(out, ref, atol=1e-4, rtol=1e-4), "mismatch vs reference"

    print("KERNEL_OK")
</pallas_src>

<mosaic_0001>
module attributes {stable_mosaic.version = 11 : i64} {
  func.func @kernel(%arg0: i32, %arg1: i32, %arg2: memref<4x12xf32, #tpu.memory_space<smem>>, %arg3: memref<2x4xf32, #tpu.memory_space<smem>>, %arg4: memref<1x4x2x128xf32, #tpu.memory_space<vmem>>, %arg5: memref<1x4x2x128xf32, #tpu.memory_space<vmem>>, %arg6: memref<1x4x2x128xf32, #tpu.memory_space<vmem>>, %arg7: memref<1x4x2x128xf32, #tpu.memory_space<vmem>>) attributes {dimension_semantics = [#tpu.dimension_semantics<parallel>, #tpu.dimension_semantics<parallel>], iteration_bounds = array<i64: 2, 1>, scalar_prefetch = 0 : i64, scratch_operands = 0 : i64, tpu.core_type = #tpu.core_type<tc>, window_params = [{transform_indices = @transform_0, window_bounds = array<i64: 4, 12>}, {transform_indices = @transform_1, window_bounds = array<i64: 2, 4>}, {transform_indices = @transform_2, window_bounds = array<i64: 1, 4, 2, 128>}, {transform_indices = @transform_3, window_bounds = array<i64: 1, 4, 2, 128>}, {transform_indices = @transform_4, window_bounds = array<i64: 1, 4, 2, 128>}, {transform_indices = @transform_5, window_bounds = array<i64: 1, 4, 2, 128>}]} {
    %c0 = arith.constant 0 : index
    %c0_0 = arith.constant 0 : index
    %c0_1 = arith.constant 0 : index
    %c0_2 = arith.constant 0 : index
    %0 = vector.load %arg4[%c0, %c0_0, %c0_1, %c0_2] : memref<1x4x2x128xf32, #tpu.memory_space<vmem>>, vector<1x1x2x128xf32>
    %1 = vector.shape_cast %0 : vector<1x1x2x128xf32> to vector<2x128xf32>
    %c0_3 = arith.constant 0 : index
    %c0_4 = arith.constant 0 : index
    %2 = memref.load %arg2[%c0_3, %c0_4] : memref<4x12xf32, #tpu.memory_space<smem>>
    %3 = vector.broadcast %2 : f32 to vector<2x128xf32>
    %4 = arith.mulf %1, %3 : vector<2x128xf32>
    %c0_5 = arith.constant 0 : index
    %c1 = arith.constant 1 : index
    %c0_6 = arith.constant 0 : index
    %c0_7 = arith.constant 0 : index
    %5 = vector.load %arg4[%c0_5, %c1, %c0_6, %c0_7] : memref<1x4x2x128xf32, #tpu.memory_space<vmem>>, vector<1x1x2x128xf32>
    %6 = vector.shape_cast %5 : vector<1x1x2x128xf32> to vector<2x128xf32>
    %c0_8 = arith.constant 0 : index
    %c1_9 = arith.constant 1 : index
    %7 = memref.load %arg2[%c0_8, %c1_9] : memref<4x12xf32, #tpu.memory_space<smem>>
    %8 = vector.broadcast %7 : f32 to vector<2x128xf32>
    %9 = arith.mulf %6, %8 : vector<2x128xf32>
    %10 = arith.addf %4, %9 : vector<2x128xf32>
    %c0_10 = arith.constant 0 : index
    %c2 = arith.constant 2 : index
    %c0_11 = arith.constant 0 : index
    %c0_12 = arith.constant 0 : index
    %11 = vector.load %arg4[%c0_10, %c2, %c0_11, %c0_12] : memref<1x4x2x128xf32, #tpu.memory_space<vmem>>, vector<1x1x2x128xf32>
    %12 = vector.shape_cast %11 : vector<1x1x2x128xf32> to vector<2x128xf32>
    %c0_13 = arith.constant 0 : index
    %c2_14 = arith.constant 2 : index
    %13 = memref.load %arg2[%c0_13, %c2_14] : memref<4x12xf32, #tpu.memory_space<smem>>
    %14 = vector.broadcast %13 : f32 to vector<2x128xf32>
    %15 = arith.mulf %12, %14 : vector<2x128xf32>
    %16 = arith.addf %10, %15 : vector<2x128xf32>
    %c0_15 = arith.constant 0 : index
    %c3 = arith.constant 3 : index
    %c0_16 = arith.constant 0 : index
    %c0_17 = arith.constant 0 : index
    %17 = vector.load %arg4[%c0_15, %c3, %c0_16, %c0_17] : memref<1x4x2x128xf32, #tpu.memory_space<vmem>>, vector<1x1x2x128xf32>
    %18 = vector.shape_cast %17 : vector<1x1x2x128xf32> to vector<2x128xf32>
    %c0_18 = arith.constant 0 : index
    %c3_19 = arith.constant 3 : index
    %19 = memref.load %arg2[%c0_18, %c3_19] : memref<4x12xf32, #tpu.memory_space<smem>>
    %20 = vector.broadcast %19 : f32 to vector<2x128xf32>
    %21 = arith.mulf %18, %20 : vector<2x128xf32>
    %22 = arith.addf %16, %21 : vector<2x128xf32>
    %c0_20 = arith.constant 0 : index
    %c0_21 = arith.constant 0 : index
    %c0_22 = arith.constant 0 : index
    %c0_23 = arith.constant 0 : index
    %23 = vector.load %arg5[%c0_20, %c0_21, %c0_22, %c0_23] : memref<1x4x2x128xf32, #tpu.memory_space<vmem>>, vector<1x1x2x128xf32>
    %24 = vector.shape_cast %23 : vector<1x1x2x128xf32> to vector<2x128xf32>
    %c0_24 = arith.constant 0 : index
    %c4 = arith.constant 4 : index
    %25 = memref.load %arg2[%c0_24, %c4] : memref<4x12xf32, #tpu.memory_space<smem>>
    %26 = vector.broadcast %25 : f32 to vector<2x128xf32>
    %27 = arith.mulf %24, %26 : vector<2x128xf32>
    %28 = arith.addf %22, %27 : vector<2x128xf32>
    %c0_25 = arith.constant 0 : index
    %c1_26 = arith.constant 1 : index
    %c0_27 = arith.constant 0 : index
    %c0_28 = arith.constant 0 : index
    %29 = vector.load %arg5[%c0_25, %c1_26, %c0_27, %c0_28] : memref<1x4x2x128xf32, #tpu.memory_space<vmem>>, vector<1x1x2x128xf32>
    %30 = vector.shape_cast %29 : vector<1x1x2x128xf32> to vector<2x128xf32>
    %c0_29 = arith.constant 0 : index
    %c5 = arith.constant 5 : index
    %31 = memref.load %arg2[%c0_29, %c5] : memref<4x12xf32, #tpu.memory_space<smem>>
    %32 = vector.broadcast %31 : f32 to vector<2x128xf32>
    %33 = arith.mulf %30, %32 : vector<2x128xf32>
    %34 = arith.addf %28, %33 : vector<2x128xf32>
    %c0_30 = arith.constant 0 : index
    %c2_31 = arith.constant 2 : index
    %c0_32 = arith.constant 0 : index
    %c0_33 = arith.constant 0 : index
    %35 = vector.load %arg5[%c0_30, %c2_31, %c0_32, %c0_33] : memref<1x4x2x128xf32, #tpu.memory_space<vmem>>, vector<1x1x2x128xf32>
    %36 = vector.shape_cast %35 : vector<1x1x2x128xf32> to vector<2x128xf32>
    %c0_34 = arith.constant 0 : index
    %c6 = arith.constant 6 : index
    %37 = memref.load %arg2[%c0_34, %c6] : memref<4x12xf32, #tpu.memory_space<smem>>
    %38 = vector.broadcast %37 : f32 to vector<2x128xf32>
    %39 = arith.mulf %36, %38 : vector<2x128xf32>
    %40 = arith.addf %34, %39 : vector<2x128xf32>
    %c0_35 = arith.constant 0 : index
    %c3_36 = arith.constant 3 : index
    %c0_37 = arith.constant 0 : index
    %c0_38 = arith.constant 0 : index
    %41 = vector.load %arg5[%c0_35, %c3_36, %c0_37, %c0_38] : memref<1x4x2x128xf32, #tpu.memory_space<vmem>>, vector<1x1x2x128xf32>
    %42 = vector.shape_cast %41 : vector<1x1x2x128xf32> to vector<2x128xf32>
    %c0_39 = arith.constant 0 : index
    %c7 = arith.constant 7 : index
    %43 = memref.load %arg2[%c0_39, %c7] : memref<4x12xf32, #tpu.memory_space<smem>>
    %44 = vector.broadcast %43 : f32 to vector<2x128xf32>
    %45 = arith.mulf %42, %44 : vector<2x128xf32>
    %46 = arith.addf %40, %45 : vector<2x128xf32>
    %c0_40 = arith.constant 0 : index
    %c0_41 = arith.constant 0 : index
    %c0_42 = arith.constant 0 : index
    %c0_43 = arith.constant 0 : index
    %47 = vector.load %arg6[%c0_40, %c0_41, %c0_42, %c0_43] : memref<1x4x2x128xf32, #tpu.memory_space<vmem>>, vector<1x1x2x128xf32>
    %48 = vector.shape_cast %47 : vector<1x1x2x128xf32> to vector<2x128xf32>
    %c0_44 = arith.constant 0 : index
    %c8 = arith.constant 8 : index
    %49 = memref.load %arg2[%c0_44, %c8] : memref<4x12xf32, #tpu.memory_space<smem>>
    %50 = vector.broadcast %49 : f32 to vector<2x128xf32>
    %51 = arith.mulf %48, %50 : vector<2x128xf32>
    %52 = arith.addf %46, %51 : vector<2x128xf32>
    %c0_45 = arith.constant 0 : index
    %c1_46 = arith.constant 1 : index
    %c0_47 = arith.constant 0 : index
    %c0_48 = arith.constant 0 : index
    %53 = vector.load %arg6[%c0_45, %c1_46, %c0_47, %c0_48] : memref<1x4x2x128xf32, #tpu.memory_space<vmem>>, vector<1x1x2x128xf32>
    %54 = vector.shape_cast %53 : vector<1x1x2x128xf32> to vector<2x128xf32>
    %c0_49 = arith.constant 0 : index
    %c9 = arith.constant 9 : index
    %55 = memref.load %arg2[%c0_49, %c9] : memref<4x12xf32, #tpu.memory_space<smem>>
    %56 = vector.broadcast %55 : f32 to vector<2x128xf32>
    %57 = arith.mulf %54, %56 : vector<2x128xf32>
    %58 = arith.addf %52, %57 : vector<2x128xf32>
    %c0_50 = arith.constant 0 : index
    %c2_51 = arith.constant 2 : index
    %c0_52 = arith.constant 0 : index
    %c0_53 = arith.constant 0 : index
    %59 = vector.load %arg6[%c0_50, %c2_51, %c0_52, %c0_53] : memref<1x4x2x128xf32, #tpu.memory_space<vmem>>, vector<1x1x2x128xf32>
    %60 = vector.shape_cast %59 : vector<1x1x2x128xf32> to vector<2x128xf32>
    %c0_54 = arith.constant 0 : index
    %c10 = arith.constant 10 : index
    %61 = memref.load %arg2[%c0_54, %c10] : memref<4x12xf32, #tpu.memory_space<smem>>
    %62 = vector.broadcast %61 : f32 to vector<2x128xf32>
    %63 = arith.mulf %60, %62 : vector<2x128xf32>
    %64 = arith.addf %58, %63 : vector<2x128xf32>
    %c0_55 = arith.constant 0 : index
    %c3_56 = arith.constant 3 : index
    %c0_57 = arith.constant 0 : index
    %c0_58 = arith.constant 0 : index
    %65 = vector.load %arg6[%c0_55, %c3_56, %c0_57, %c0_58] : memref<1x4x2x128xf32, #tpu.memory_space<vmem>>, vector<1x1x2x128xf32>
    %66 = vector.shape_cast %65 : vector<1x1x2x128xf32> to vector<2x128xf32>
    %c0_59 = arith.constant 0 : index
    %c11 = arith.constant 11 : index
    %67 = memref.load %arg2[%c0_59, %c11] : memref<4x12xf32, #tpu.memory_space<smem>>
    %68 = vector.broadcast %67 : f32 to vector<2x128xf32>
    %69 = arith.mulf %66, %68 : vector<2x128xf32>
    %70 = arith.addf %64, %69 : vector<2x128xf32>
    %71 = arith.index_cast %arg0 : i32 to index
    %c0_60 = arith.constant 0 : index
    %72 = memref.load %arg3[%71, %c0_60] : memref<2x4xf32, #tpu.memory_space<smem>>
    %73 = vector.broadcast %72 : f32 to vector<2x128xf32>
    %74 = arith.addf %70, %73 : vector<2x128xf32>
    %c0_61 = arith.constant 0 : index
    %c0_62 = arith.constant 0 : index
    %c0_63 = arith.constant 0 : index
    %c0_64 = arith.constant 0 : index
    %75 = vector.load %arg7[%c0_61, %c0_62, %c0_63, %c0_64] : memref<1x4x2x128xf32, #tpu.memory_space<vmem>>, vector<1x1x2x128xf32>
    %76 = vector.shape_cast %75 : vector<1x1x2x128xf32> to vector<2x128xf32>
    %77 = vector.shape_cast %74 : vector<2x128xf32> to vector<1x1x2x128xf32>
    tpu.vector_store %arg7[%c0_61, %c0_62, %c0_63, %c0_64], %77 {strides = array<i32>} : memref<1x4x2x128xf32, #tpu.memory_space<vmem>>, vector<1x1x2x128xf32>,
    %c0_65 = arith.constant 0 : index
    %c0_66 = arith.constant 0 : index
    %c0_67 = arith.constant 0 : index
    %c0_68 = arith.constant 0 : index
    %78 = vector.load %arg4[%c0_65, %c0_66, %c0_67, %c0_68] : memref<1x4x2x128xf32, #tpu.memory_space<vmem>>, vector<1x1x2x128xf32>
    %79 = vector.shape_cast %78 : vector<1x1x2x128xf32> to vector<2x128xf32>
    %c1_69 = arith.constant 1 : index
    %c0_70 = arith.constant 0 : index
    %80 = memref.load %arg2[%c1_69, %c0_70] : memref<4x12xf32, #tpu.memory_space<smem>>
    %81 = vector.broadcast %80 : f32 to vector<2x128xf32>
    %82 = arith.mulf %79, %81 : vector<2x128xf32>
    %c0_71 = arith.constant 0 : index
    %c1_72 = arith.constant 1 : index
    %c0_73 = arith.constant 0 : index
    %c0_74 = arith.constant 0 : index
    %83 = vector.load %arg4[%c0_71, %c1_72, %c0_73, %c0_74] : memref<1x4x2x128xf32, #tpu.memory_space<vmem>>, vector<1x1x2x128xf32>
    %84 = vector.shape_cast %83 : vector<1x1x2x128xf32> to vector<2x128xf32>
    %c1_75 = arith.constant 1 : index
    %c1_76 = arith.constant 1 : index
    %85 = memref.load %arg2[%c1_75, %c1_76] : memref<4x12xf32, #tpu.memory_space<smem>>
    %86 = vector.broadcast %85 : f32 to vector<2x128xf32>
    %87 = arith.mulf %84, %86 : vector<2x128xf32>
    %88 = arith.addf %82, %87 : vector<2x128xf32>
    %c0_77 = arith.constant 0 : index
    %c2_78 = arith.constant 2 : index
    %c0_79 = arith.constant 0 : index
    %c0_80 = arith.constant 0 : index
    %89 = vector.load %arg4[%c0_77, %c2_78, %c0_79, %c0_80] : memref<1x4x2x128xf32, #tpu.memory_space<vmem>>, vector<1x1x2x128xf32>
    %90 = vector.shape_cast %89 : vector<1x1x2x128xf32> to vector<2x128xf32>
    %c1_81 = arith.constant 1 : index
    %c2_82 = arith.constant 2 : index
    %91 = memref.load %arg2[%c1_81, %c2_82] : memref<4x12xf32, #tpu.memory_space<smem>>
    %92 = vector.broadcast %91 : f32 to vector<2x128xf32>
    %93 = arith.mulf %90, %92 : vector<2x128xf32>
    %94 = arith.addf %88, %93 : vector<2x128xf32>
    %c0_83 = arith.constant 0 : index
    %c3_84 = arith.constant 3 : index
    %c0_85 = arith.constant 0 : index
    %c0_86 = arith.constant 0 : index
    %95 = vector.load %arg4[%c0_83, %c3_84, %c0_85, %c0_86] : memref<1x4x2x128xf32, #tpu.memory_space<vmem>>, vector<1x1x2x128xf32>
    %96 = vector.shape_cast %95 : vector<1x1x2x128xf32> to vector<2x128xf32>
    %c1_87 = arith.constant 1 : index
    %c3_88 = arith.constant 3 : index
    %97 = memref.load %arg2[%c1_87, %c3_88] : memref<4x12xf32, #tpu.memory_space<smem>>
    %98 = vector.broadcast %97 : f32 to vector<2x128xf32>
    %99 = arith.mulf %96, %98 : vector<2x128xf32>
    %100 = arith.addf %94, %99 : vector<2x128xf32>
    %c0_89 = arith.constant 0 : index
    %c0_90 = arith.constant 0 : index
    %c0_91 = arith.constant 0 : index
    %c0_92 = arith.constant 0 : index
    %101 = vector.load %arg5[%c0_89, %c0_90, %c0_91, %c0_92] : memref<1x4x2x128xf32, #tpu.memory_space<vmem>>, vector<1x1x2x128xf32>
    %102 = vector.shape_cast %101 : vector<1x1x2x128xf32> to vector<2x128xf32>
    %c1_93 = arith.constant 1 : index
    %c4_94 = arith.constant 4 : index
    %103 = memref.load %arg2[%c1_93, %c4_94] : memref<4x12xf32, #tpu.memory_space<smem>>
    %104 = vector.broadcast %103 : f32 to vector<2x128xf32>
    %105 = arith.mulf %102, %104 : vector<2x128xf32>
    %106 = arith.addf %100, %105 : vector<2x128xf32>
    %c0_95 = arith.constant 0 : index
    %c1_96 = arith.constant 1 : index
    %c0_97 = arith.constant 0 : index
    %c0_98 = arith.constant 0 : index
    %107 = vector.load %arg5[%c0_95, %c1_96, %c0_97, %c0_98] : memref<1x4x2x128xf32, #tpu.memory_space<vmem>>, vector<1x1x2x128xf32>
    %108 = vector.shape_cast %107 : vector<1x1x2x128xf32> to vector<2x128xf32>
    %c1_99 = arith.constant 1 : index
    %c5_100 = arith.constant 5 : index
    %109 = memref.load %arg2[%c1_99, %c5_100] : memref<4x12xf32, #tpu.memory_space<smem>>
    %110 = vector.broadcast %109 : f32 to vector<2x128xf32>
    %111 = arith.mulf %108, %110 : vector<2x128xf32>
    %112 = arith.addf %106, %111 : vector<2x128xf32>
    %c0_101 = arith.constant 0 : index
    %c2_102 = arith.constant 2 : index
    %c0_103 = arith.constant 0 : index
    %c0_104 = arith.constant 0 : index
    %113 = vector.load %arg5[%c0_101, %c2_102, %c0_103, %c0_104] : memref<1x4x2x128xf32, #tpu.memory_space<vmem>>, vector<1x1x2x128xf32>
    %114 = vector.shape_cast %113 : vector<1x1x2x128xf32> to vector<2x128xf32>
    %c1_105 = arith.constant 1 : index
    %c6_106 = arith.constant 6 : index
    %115 = memref.load %arg2[%c1_105, %c6_106] : memref<4x12xf32, #tpu.memory_space<smem>>
    %116 = vector.broadcast %115 : f32 to vector<2x128xf32>
    %117 = arith.mulf %114, %116 : vector<2x128xf32>
    %118 = arith.addf %112, %117 : vector<2x128xf32>
    %c0_107 = arith.constant 0 : index
    %c3_108 = arith.constant 3 : index
    %c0_109 = arith.constant 0 : index
    %c0_110 = arith.constant 0 : index
    %119 = vector.load %arg5[%c0_107, %c3_108, %c0_109, %c0_110] : memref<1x4x2x128xf32, #tpu.memory_space<vmem>>, vector<1x1x2x128xf32>
    %120 = vector.shape_cast %119 : vector<1x1x2x128xf32> to vector<2x128xf32>
    %c1_111 = arith.constant 1 : index
    %c7_112 = arith.constant 7 : index
    %121 = memref.load %arg2[%c1_111, %c7_112] : memref<4x12xf32, #tpu.memory_space<smem>>
    %122 = vector.broadcast %121 : f32 to vector<2x128xf32>
    %123 = arith.mulf %120, %122 : vector<2x128xf32>
    %124 = arith.addf %118, %123 : vector<2x128xf32>
    %c0_113 = arith.constant 0 : index
    %c0_114 = arith.constant 0 : index
    %c0_115 = arith.constant 0 : index
    %c0_116 = arith.constant 0 : index
    %125 = vector.load %arg6[%c0_113, %c0_114, %c0_115, %c0_116] : memref<1x4x2x128xf32, #tpu.memory_space<vmem>>, vector<1x1x2x128xf32>
    %126 = vector.shape_cast %125 : vector<1x1x2x128xf32> to vector<2x128xf32>
    %c1_117 = arith.constant 1 : index
    %c8_118 = arith.constant 8 : index
    %127 = memref.load %arg2[%c1_117, %c8_118] : memref<4x12xf32, #tpu.memory_space<smem>>
    %128 = vector.broadcast %127 : f32 to vector<2x128xf32>
    %129 = arith.mulf %126, %128 : vector<2x128xf32>
    %130 = arith.addf %124, %129 : vector<2x128xf32>
    %c0_119 = arith.constant 0 : index
    %c1_120 = arith.constant 1 : index
    %c0_121 = arith.constant 0 : index
    %c0_122 = arith.constant 0 : index
    %131 = vector.load %arg6[%c0_119, %c1_120, %c0_121, %c0_122] : memref<1x4x2x128xf32, #tpu.memory_space<vmem>>, vector<1x1x2x128xf32>
    %132 = vector.shape_cast %131 : vector<1x1x2x128xf32> to vector<2x128xf32>
    %c1_123 = arith.constant 1 : index
    %c9_124 = arith.constant 9 : index
    %133 = memref.load %arg2[%c1_123, %c9_124] : memref<4x12xf32, #tpu.memory_space<smem>>
    %134 = vector.broadcast %133 : f32 to vector<2x128xf32>
    %135 = arith.mulf %132, %134 : vector<2x128xf32>
    %136 = arith.addf %130, %135 : vector<2x128xf32>
    %c0_125 = arith.constant 0 : index
    %c2_126 = arith.constant 2 : index
    %c0_127 = arith.constant 0 : index
    %c0_128 = arith.constant 0 : index
    %137 = vector.load %arg6[%c0_125, %c2_126, %c0_127, %c0_128] : memref<1x4x2x128xf32, #tpu.memory_space<vmem>>, vector<1x1x2x128xf32>
    %138 = vector.shape_cast %137 : vector<1x1x2x128xf32> to vector<2x128xf32>
    %c1_129 = arith.constant 1 : index
    %c10_130 = arith.constant 10 : index
    %139 = memref.load %arg2[%c1_129, %c10_130] : memref<4x12xf32, #tpu.memory_space<smem>>
    %140 = vector.broadcast %139 : f32 to vector<2x128xf32>
    %141 = arith.mulf %138, %140 : vector<2x128xf32>
    %142 = arith.addf %136, %141 : vector<2x128xf32>
    %c0_131 = arith.constant 0 : index
    %c3_132 = arith.constant 3 : index
    %c0_133 = arith.constant 0 : index
    %c0_134 = arith.constant 0 : index
    %143 = vector.load %arg6[%c0_131, %c3_132, %c0_133, %c0_134] : memref<1x4x2x128xf32, #tpu.memory_space<vmem>>, vector<1x1x2x128xf32>
    %144 = vector.shape_cast %143 : vector<1x1x2x128xf32> to vector<2x128xf32>
    %c1_135 = arith.constant 1 : index
    %c11_136 = arith.constant 11 : index
    %145 = memref.load %arg2[%c1_135, %c11_136] : memref<4x12xf32, #tpu.memory_space<smem>>
    %146 = vector.broadcast %145 : f32 to vector<2x128xf32>
    %147 = arith.mulf %144, %146 : vector<2x128xf32>
    %148 = arith.addf %142, %147 : vector<2x128xf32>
    %149 = arith.index_cast %arg0 : i32 to index
    %c1_137 = arith.constant 1 : index
    %150 = memref.load %arg3[%149, %c1_137] : memref<2x4xf32, #tpu.memory_space<smem>>
    %151 = vector.broadcast %150 : f32 to vector<2x128xf32>
    %152 = arith.addf %148, %151 : vector<2x128xf32>
    %c0_138 = arith.constant 0 : index
    %c1_139 = arith.constant 1 : index
    %c0_140 = arith.constant 0 : index
    %c0_141 = arith.constant 0 : index
    %153 = vector.load %arg7[%c0_138, %c1_139, %c0_140, %c0_141] : memref<1x4x2x128xf32, #tpu.memory_space<vmem>>, vector<1x1x2x128xf32>
    %154 = vector.shape_cast %153 : vector<1x1x2x128xf32> to vector<2x128xf32>
    %155 = vector.shape_cast %152 : vector<2x128xf32> to vector<1x1x2x128xf32>
    tpu.vector_store %arg7[%c0_138, %c1_139, %c0_140, %c0_141], %155 {strides = array<i32>} : memref<1x4x2x128xf32, #tpu.memory_space<vmem>>, vector<1x1x2x128xf32>,
    %c0_142 = arith.constant 0 : index
    %c0_143 = arith.constant 0 : index
    %c0_144 = arith.constant 0 : index
    %c0_145 = arith.constant 0 : index
    %156 = vector.load %arg4[%c0_142, %c0_143, %c0_144, %c0_145] : memref<1x4x2x128xf32, #tpu.memory_space<vmem>>, vector<1x1x2x128xf32>
    %157 = vector.shape_cast %156 : vector<1x1x2x128xf32> to vector<2x128xf32>
    %c2_146 = arith.constant 2 : index
    %c0_147 = arith.constant 0 : index
    %158 = memref.load %arg2[%c2_146, %c0_147] : memref<4x12xf32, #tpu.memory_space<smem>>
    %159 = vector.broadcast %158 : f32 to vector<2x128xf32>
    %160 = arith.mulf %157, %159 : vector<2x128xf32>
    %c0_148 = arith.constant 0 : index
    %c1_149 = arith.constant 1 : index
    %c0_150 = arith.constant 0 : index
    %c0_151 = arith.constant 0 : index
    %161 = vector.load %arg4[%c0_148, %c1_149, %c0_150, %c0_151] : memref<1x4x2x128xf32, #tpu.memory_space<vmem>>, vector<1x1x2x128xf32>
    %162 = vector.shape_cast %161 : vector<1x1x2x128xf32> to vector<2x128xf32>
    %c2_152 = arith.constant 2 : index
    %c1_153 = arith.constant 1 : index
    %163 = memref.load %arg2[%c2_152, %c1_153] : memref<4x12xf32, #tpu.memory_space<smem>>
    %164 = vector.broadcast %163 : f32 to vector<2x128xf32>
    %165 = arith.mulf %162, %164 : vector<2x128xf32>
    %166 = arith.addf %160, %165 : vector<2x128xf32>
    %c0_154 = arith.constant 0 : index
    %c2_155 = arith.constant 2 : index
    %c0_156 = arith.constant 0 : index
    %c0_157 = arith.constant 0 : index
    %167 = vector.load %arg4[%c0_154, %c2_155, %c0_156, %c0_157] : memref<1x4x2x128xf32, #tpu.memory_space<vmem>>, vector<1x1x2x128xf32>
    %168 = vector.shape_cast %167 : vector<1x1x2x128xf32> to vector<2x128xf32>
    %c2_158 = arith.constant 2 : index
    %c2_159 = arith.constant 2 : index
    %169 = memref.load %arg2[%c2_158, %c2_159] : memref<4x12xf32, #tpu.memory_space<smem>>
    %170 = vector.broadcast %169 : f32 to vector<2x128xf32>
    %171 = arith.mulf %168, %170 : vector<2x128xf32>
    %172 = arith.addf %166, %171 : vector<2x128xf32>
    %c0_160 = arith.constant 0 : index
    %c3_161 = arith.constant 3 : index
    %c0_162 = arith.constant 0 : index
    %c0_163 = arith.constant 0 : index
    %173 = vector.load %arg4[%c0_160, %c3_161, %c0_162, %c0_163] : memref<1x4x2x128xf32, #tpu.memory_space<vmem>>, vector<1x1x2x128xf32>
    %174 = vector.shape_cast %173 : vector<1x1x2x128xf32> to vector<2x128xf32>
    %c2_164 = arith.constant 2 : index
    %c3_165 = arith.constant 3 : index
    %175 = memref.load %arg2[%c2_164, %c3_165] : memref<4x12xf32, #tpu.memory_space<smem>>
    %176 = vector.broadcast %175 : f32 to vector<2x128xf32>
    %177 = arith.mulf %174, %176 : vector<2x128xf32>
    %178 = arith.addf %172, %177 : vector<2x128xf32>
    %c0_166 = arith.constant 0 : index
    %c0_167 = arith.constant 0 : index
    %c0_168 = arith.constant 0 : index
    %c0_169 = arith.constant 0 : index
    %179 = vector.load %arg5[%c0_166, %c0_167, %c0_168, %c0_169] : memref<1x4x2x128xf32, #tpu.memory_space<vmem>>, vector<1x1x2x128xf32>
    %180 = vector.shape_cast %179 : vector<1x1x2x128xf32> to vector<2x128xf32>
    %c2_170 = arith.constant 2 : index
    %c4_171 = arith.constant 4 : index
    %181 = memref.load %arg2[%c2_170, %c4_171] : memref<4x12xf32, #tpu.memory_space<smem>>
    %182 = vector.broadcast %181 : f32 to vector<2x128xf32>
    %183 = arith.mulf %180, %182 : vector<2x128xf32>
    %184 = arith.addf %178, %183 : vector<2x128xf32>
    %c0_172 = arith.constant 0 : index
    %c1_173 = arith.constant 1 : index
    %c0_174 = arith.constant 0 : index
    %c0_175 = arith.constant 0 : index
    %185 = vector.load %arg5[%c0_172, %c1_173, %c0_174, %c0_175] : memref<1x4x2x128xf32, #tpu.memory_space<vmem>>, vector<1x1x2x128xf32>
    %186 = vector.shape_cast %185 : vector<1x1x2x128xf32> to vector<2x128xf32>
    %c2_176 = arith.constant 2 : index
    %c5_177 = arith.constant 5 : index
    %187 = memref.load %arg2[%c2_176, %c5_177] : memref<4x12xf32, #tpu.memory_space<smem>>
    %188 = vector.broadcast %187 : f32 to vector<2x128xf32>
    %189 = arith.mulf %186, %188 : vector<2x128xf32>
    %190 = arith.addf %184, %189 : vector<2x128xf32>
    %c0_178 = arith.constant 0 : index
    %c2_179 = arith.constant 2 : index
    %c0_180 = arith.constant 0 : index
    %c0_181 = arith.constant 0 : index
    %191 = vector.load %arg5[%c0_178, %c2_179, %c0_180, %c0_181] : memref<1x4x2x128xf32, #tpu.memory_space<vmem>>, vector<1x1x2x128xf32>
    %192 = vector.shape_cast %191 : vector<1x1x2x128xf32> to vector<2x128xf32>
    %c2_182 = arith.constant 2 : index
    %c6_183 = arith.constant 6 : index
    %193 = memref.load %arg2[%c2_182, %c6_183] : memref<4x12xf32, #tpu.memory_space<smem>>
    %194 = vector.broadcast %193 : f32 to vector<2x128xf32>
    %195 = arith.mulf %192, %194 : vector<2x128xf32>
    %196 = arith.addf %190, %195 : vector<2x128xf32>
    %c0_184 = arith.constant 0 : index
    %c3_185 = arith.constant 3 : index
    %c0_186 = arith.constant 0 : index
    %c0_187 = arith.constant 0 : index
    %197 = vector.load %arg5[%c0_184, %c3_185, %c0_186, %c0_187] : memref<1x4x2x128xf32, #tpu.memory_space<vmem>>, vector<1x1x2x128xf32>
    %198 = vector.shape_cast %197 : vector<1x1x2x128xf32> to vector<2x128xf32>
    %c2_188 = arith.constant 2 : index
    %c7_189 = arith.constant 7 : index
    %199 = memref.load %arg2[%c2_188, %c7_189] : memref<4x12xf32, #tpu.memory_space<smem>>
    %200 = vector.broadcast %199 : f32 to vector<2x128xf32>
    %201 = arith.mulf %198, %200 : vector<2x128xf32>
    %202 = arith.addf %196, %201 : vector<2x128xf32>
    %c0_190 = arith.constant 0 : index
    %c0_191 = arith.constant 0 : index
    %c0_192 = arith.constant 0 : index
    %c0_193 = arith.constant 0 : index
    %203 = vector.load %arg6[%c0_190, %c0_191, %c0_192, %c0_193] : memref<1x4x2x128xf32, #tpu.memory_space<vmem>>, vector<1x1x2x128xf32>
    %204 = vector.shape_cast %203 : vector<1x1x2x128xf32> to vector<2x128xf32>
    %c2_194 = arith.constant 2 : index
    %c8_195 = arith.constant 8 : index
    %205 = memref.load %arg2[%c2_194, %c8_195] : memref<4x12xf32, #tpu.memory_space<smem>>
    %206 = vector.broadcast %205 : f32 to vector<2x128xf32>
    %207 = arith.mulf %204, %206 : vector<2x128xf32>
    %208 = arith.addf %202, %207 : vector<2x128xf32>
    %c0_196 = arith.constant 0 : index
    %c1_197 = arith.constant 1 : index
    %c0_198 = arith.constant 0 : index
    %c0_199 = arith.constant 0 : index
    %209 = vector.load %arg6[%c0_196, %c1_197, %c0_198, %c0_199] : memref<1x4x2x128xf32, #tpu.memory_space<vmem>>, vector<1x1x2x128xf32>
    %210 = vector.shape_cast %209 : vector<1x1x2x128xf32> to vector<2x128xf32>
    %c2_200 = arith.constant 2 : index
    %c9_201 = arith.constant 9 : index
    %211 = memref.load %arg2[%c2_200, %c9_201] : memref<4x12xf32, #tpu.memory_space<smem>>
    %212 = vector.broadcast %211 : f32 to vector<2x128xf32>
    %213 = arith.mulf %210, %212 : vector<2x128xf32>
    %214 = arith.addf %208, %213 : vector<2x128xf32>
    %c0_202 = arith.constant 0 : index
    %c2_203 = arith.constant 2 : index
    %c0_204 = arith.constant 0 : index
    %c0_205 = arith.constant 0 : index
    %215 = vector.load %arg6[%c0_202, %c2_203, %c0_204, %c0_205] : memref<1x4x2x128xf32, #tpu.memory_space<vmem>>, vector<1x1x2x128xf32>
    %216 = vector.shape_cast %215 : vector<1x1x2x128xf32> to vector<2x128xf32>
    %c2_206 = arith.constant 2 : index
    %c10_207 = arith.constant 10 : index
    %217 = memref.load %arg2[%c2_206, %c10_207] : memref<4x12xf32, #tpu.memory_space<smem>>
    %218 = vector.broadcast %217 : f32 to vector<2x128xf32>
    %219 = arith.mulf %216, %218 : vector<2x128xf32>
    %220 = arith.addf %214, %219 : vector<2x128xf32>
    %c0_208 = arith.constant 0 : index
    %c3_209 = arith.constant 3 : index
    %c0_210 = arith.constant 0 : index
    %c0_211 = arith.constant 0 : index
    %221 = vector.load %arg6[%c0_208, %c3_209, %c0_210, %c0_211] : memref<1x4x2x128xf32, #tpu.memory_space<vmem>>, vector<1x1x2x128xf32>
    %222 = vector.shape_cast %221 : vector<1x1x2x128xf32> to vector<2x128xf32>
    %c2_212 = arith.constant 2 : index
    %c11_213 = arith.constant 11 : index
    %223 = memref.load %arg2[%c2_212, %c11_213] : memref<4x12xf32, #tpu.memory_space<smem>>
    %224 = vector.broadcast %223 : f32 to vector<2x128xf32>
    %225 = arith.mulf %222, %224 : vector<2x128xf32>
    %226 = arith.addf %220, %225 : vector<2x128xf32>
    %227 = arith.index_cast %arg0 : i32 to index
    %c2_214 = arith.constant 2 : index
    %228 = memref.load %arg3[%227, %c2_214] : memref<2x4xf32, #tpu.memory_space<smem>>
    %229 = vector.broadcast %228 : f32 to vector<2x128xf32>
    %230 = arith.addf %226, %229 : vector<2x128xf32>
    %c0_215 = arith.constant 0 : index
    %c2_216 = arith.constant 2 : index
    %c0_217 = arith.constant 0 : index
    %c0_218 = arith.constant 0 : index
    %231 = vector.load %arg7[%c0_215, %c2_216, %c0_217, %c0_218] : memref<1x4x2x128xf32, #tpu.memory_space<vmem>>, vector<1x1x2x128xf32>
    %232 = vector.shape_cast %231 : vector<1x1x2x128xf32> to vector<2x128xf32>
    %233 = vector.shape_cast %230 : vector<2x128xf32> to vector<1x1x2x128xf32>
    tpu.vector_store %arg7[%c0_215, %c2_216, %c0_217, %c0_218], %233 {strides = array<i32>} : memref<1x4x2x128xf32, #tpu.memory_space<vmem>>, vector<1x1x2x128xf32>,
    %c0_219 = arith.constant 0 : index
    %c0_220 = arith.constant 0 : index
    %c0_221 = arith.constant 0 : index
    %c0_222 = arith.constant 0 : index
    %234 = vector.load %arg4[%c0_219, %c0_220, %c0_221, %c0_222] : memref<1x4x2x128xf32, #tpu.memory_space<vmem>>, vector<1x1x2x128xf32>
    %235 = vector.shape_cast %234 : vector<1x1x2x128xf32> to vector<2x128xf32>
    %c3_223 = arith.constant 3 : index
    %c0_224 = arith.constant 0 : index
    %236 = memref.load %arg2[%c3_223, %c0_224] : memref<4x12xf32, #tpu.memory_space<smem>>
    %237 = vector.broadcast %236 : f32 to vector<2x128xf32>
    %238 = arith.mulf %235, %237 : vector<2x128xf32>
    %c0_225 = arith.constant 0 : index
    %c1_226 = arith.constant 1 : index
    %c0_227 = arith.constant 0 : index
    %c0_228 = arith.constant 0 : index
    %239 = vector.load %arg4[%c0_225, %c1_226, %c0_227, %c0_228] : memref<1x4x2x128xf32, #tpu.memory_space<vmem>>, vector<1x1x2x128xf32>
    %240 = vector.shape_cast %239 : vector<1x1x2x128xf32> to vector<2x128xf32>
    %c3_229 = arith.constant 3 : index
    %c1_230 = arith.constant 1 : index
    %241 = memref.load %arg2[%c3_229, %c1_230] : memref<4x12xf32, #tpu.memory_space<smem>>
    %242 = vector.broadcast %241 : f32 to vector<2x128xf32>
    %243 = arith.mulf %240, %242 : vector<2x128xf32>
    %244 = arith.addf %238, %243 : vector<2x128xf32>
    %c0_231 = arith.constant 0 : index
    %c2_232 = arith.constant 2 : index
    %c0_233 = arith.constant 0 : index
    %c0_234 = arith.constant 0 : index
    %245 = vector.load %arg4[%c0_231, %c2_232, %c0_233, %c0_234] : memref<1x4x2x128xf32, #tpu.memory_space<vmem>>, vector<1x1x2x128xf32>
    %246 = vector.shape_cast %245 : vector<1x1x2x128xf32> to vector<2x128xf32>
    %c3_235 = arith.constant 3 : index
    %c2_236 = arith.constant 2 : index
    %247 = memref.load %arg2[%c3_235, %c2_236] : memref<4x12xf32, #tpu.memory_space<smem>>
    %248 = vector.broadcast %247 : f32 to vector<2x128xf32>
    %249 = arith.mulf %246, %248 : vector<2x128xf32>
    %250 = arith.addf %244, %249 : vector<2x128xf32>
    %c0_237 = arith.constant 0 : index
    %c3_238 = arith.constant 3 : index
    %c0_239 = arith.constant 0 : index
    %c0_240 = arith.constant 0 : index
    %251 = vector.load %arg4[%c0_237, %c3_238, %c0_239, %c0_240] : memref<1x4x2x128xf32, #tpu.memory_space<vmem>>, vector<1x1x2x128xf32>
    %252 = vector.shape_cast %251 : vector<1x1x2x128xf32> to vector<2x128xf32>
    %c3_241 = arith.constant 3 : index
    %c3_242 = arith.constant 3 : index
    %253 = memref.load %arg2[%c3_241, %c3_242] : memref<4x12xf32, #tpu.memory_space<smem>>
    %254 = vector.broadcast %253 : f32 to vector<2x128xf32>
    %255 = arith.mulf %252, %254 : vector<2x128xf32>
    %256 = arith.addf %250, %255 : vector<2x128xf32>
    %c0_243 = arith.constant 0 : index
    %c0_244 = arith.constant 0 : index
    %c0_245 = arith.constant 0 : index
    %c0_246 = arith.constant 0 : index
    %257 = vector.load %arg5[%c0_243, %c0_244, %c0_245, %c0_246] : memref<1x4x2x128xf32, #tpu.memory_space<vmem>>, vector<1x1x2x128xf32>
    %258 = vector.shape_cast %257 : vector<1x1x2x128xf32> to vector<2x128xf32>
    %c3_247 = arith.constant 3 : index
    %c4_248 = arith.constant 4 : index
    %259 = memref.load %arg2[%c3_247, %c4_248] : memref<4x12xf32, #tpu.memory_space<smem>>
    %260 = vector.broadcast %259 : f32 to vector<2x128xf32>
    %261 = arith.mulf %258, %260 : vector<2x128xf32>
    %262 = arith.addf %256, %261 : vector<2x128xf32>
    %c0_249 = arith.constant 0 : index
    %c1_250 = arith.constant 1 : index
    %c0_251 = arith.constant 0 : index
    %c0_252 = arith.constant 0 : index
    %263 = vector.load %arg5[%c0_249, %c1_250, %c0_251, %c0_252] : memref<1x4x2x128xf32, #tpu.memory_space<vmem>>, vector<1x1x2x128xf32>
    %264 = vector.shape_cast %263 : vector<1x1x2x128xf32> to vector<2x128xf32>
    %c3_253 = arith.constant 3 : index
    %c5_254 = arith.constant 5 : index
    %265 = memref.load %arg2[%c3_253, %c5_254] : memref<4x12xf32, #tpu.memory_space<smem>>
    %266 = vector.broadcast %265 : f32 to vector<2x128xf32>
    %267 = arith.mulf %264, %266 : vector<2x128xf32>
    %268 = arith.addf %262, %267 : vector<2x128xf32>
    %c0_255 = arith.constant 0 : index
    %c2_256 = arith.constant 2 : index
    %c0_257 = arith.constant 0 : index
    %c0_258 = arith.constant 0 : index
    %269 = vector.load %arg5[%c0_255, %c2_256, %c0_257, %c0_258] : memref<1x4x2x128xf32, #tpu.memory_space<vmem>>, vector<1x1x2x128xf32>
    %270 = vector.shape_cast %269 : vector<1x1x2x128xf32> to vector<2x128xf32>
    %c3_259 = arith.constant 3 : index
    %c6_260 = arith.constant 6 : index
    %271 = memref.load %arg2[%c3_259, %c6_260] : memref<4x12xf32, #tpu.memory_space<smem>>
    %272 = vector.broadcast %271 : f32 to vector<2x128xf32>
    %273 = arith.mulf %270, %272 : vector<2x128xf32>
    %274 = arith.addf %268, %273 : vector<2x128xf32>
    %c0_261 = arith.constant 0 : index
    %c3_262 = arith.constant 3 : index
    %c0_263 = arith.constant 0 : index
    %c0_264 = arith.constant 0 : index
    %275 = vector.load %arg5[%c0_261, %c3_262, %c0_263, %c0_264] : memref<1x4x2x128xf32, #tpu.memory_space<vmem>>, vector<1x1x2x128xf32>
    %276 = vector.shape_cast %275 : vector<1x1x2x128xf32> to vector<2x128xf32>
    %c3_265 = arith.constant 3 : index
    %c7_266 = arith.constant 7 : index
    %277 = memref.load %arg2[%c3_265, %c7_266] : memref<4x12xf32, #tpu.memory_space<smem>>
    %278 = vector.broadcast %277 : f32 to vector<2x128xf32>
    %279 = arith.mulf %276, %278 : vector<2x128xf32>
    %280 = arith.addf %274, %279 : vector<2x128xf32>
    %c0_267 = arith.constant 0 : index
    %c0_268 = arith.constant 0 : index
    %c0_269 = arith.constant 0 : index
    %c0_270 = arith.constant 0 : index
    %281 = vector.load %arg6[%c0_267, %c0_268, %c0_269, %c0_270] : memref<1x4x2x128xf32, #tpu.memory_space<vmem>>, vector<1x1x2x128xf32>
    %282 = vector.shape_cast %281 : vector<1x1x2x128xf32> to vector<2x128xf32>
    %c3_271 = arith.constant 3 : index
    %c8_272 = arith.constant 8 : index
    %283 = memref.load %arg2[%c3_271, %c8_272] : memref<4x12xf32, #tpu.memory_space<smem>>
    %284 = vector.broadcast %283 : f32 to vector<2x128xf32>
    %285 = arith.mulf %282, %284 : vector<2x128xf32>
    %286 = arith.addf %280, %285 : vector<2x128xf32>
    %c0_273 = arith.constant 0 : index
    %c1_274 = arith.constant 1 : index
    %c0_275 = arith.constant 0 : index
    %c0_276 = arith.constant 0 : index
    %287 = vector.load %arg6[%c0_273, %c1_274, %c0_275, %c0_276] : memref<1x4x2x128xf32, #tpu.memory_space<vmem>>, vector<1x1x2x128xf32>
    %288 = vector.shape_cast %287 : vector<1x1x2x128xf32> to vector<2x128xf32>
    %c3_277 = arith.constant 3 : index
    %c9_278 = arith.constant 9 : index
    %289 = memref.load %arg2[%c3_277, %c9_278] : memref<4x12xf32, #tpu.memory_space<smem>>
    %290 = vector.broadcast %289 : f32 to vector<2x128xf32>
    %291 = arith.mulf %288, %290 : vector<2x128xf32>
    %292 = arith.addf %286, %291 : vector<2x128xf32>
    %c0_279 = arith.constant 0 : index
    %c2_280 = arith.constant 2 : index
    %c0_281 = arith.constant 0 : index
    %c0_282 = arith.constant 0 : index
    %293 = vector.load %arg6[%c0_279, %c2_280, %c0_281, %c0_282] : memref<1x4x2x128xf32, #tpu.memory_space<vmem>>, vector<1x1x2x128xf32>
    %294 = vector.shape_cast %293 : vector<1x1x2x128xf32> to vector<2x128xf32>
    %c3_283 = arith.constant 3 : index
    %c10_284 = arith.constant 10 : index
    %295 = memref.load %arg2[%c3_283, %c10_284] : memref<4x12xf32, #tpu.memory_space<smem>>
    %296 = vector.broadcast %295 : f32 to vector<2x128xf32>
    %297 = arith.mulf %294, %296 : vector<2x128xf32>
    %298 = arith.addf %292, %297 : vector<2x128xf32>
    %c0_285 = arith.constant 0 : index
    %c3_286 = arith.constant 3 : index
    %c0_287 = arith.constant 0 : index
    %c0_288 = arith.constant 0 : index
    %299 = vector.load %arg6[%c0_285, %c3_286, %c0_287, %c0_288] : memref<1x4x2x128xf32, #tpu.memory_space<vmem>>, vector<1x1x2x128xf32>
    %300 = vector.shape_cast %299 : vector<1x1x2x128xf32> to vector<2x128xf32>
    %c3_289 = arith.constant 3 : index
    %c11_290 = arith.constant 11 : index
    %301 = memref.load %arg2[%c3_289, %c11_290] : memref<4x12xf32, #tpu.memory_space<smem>>
    %302 = vector.broadcast %301 : f32 to vector<2x128xf32>
    %303 = arith.mulf %300, %302 : vector<2x128xf32>
    %304 = arith.addf %298, %303 : vector<2x128xf32>
    %305 = arith.index_cast %arg0 : i32 to index
    %c3_291 = arith.constant 3 : index
    %306 = memref.load %arg3[%305, %c3_291] : memref<2x4xf32, #tpu.memory_space<smem>>
    %307 = vector.broadcast %306 : f32 to vector<2x128xf32>
    %308 = arith.addf %304, %307 : vector<2x128xf32>
    %c0_292 = arith.constant 0 : index
    %c3_293 = arith.constant 3 : index
    %c0_294 = arith.constant 0 : index
    %c0_295 = arith.constant 0 : index
    %309 = vector.load %arg7[%c0_292, %c3_293, %c0_294, %c0_295] : memref<1x4x2x128xf32, #tpu.memory_space<vmem>>, vector<1x1x2x128xf32>
    %310 = vector.shape_cast %309 : vector<1x1x2x128xf32> to vector<2x128xf32>
    %311 = vector.shape_cast %308 : vector<2x128xf32> to vector<1x1x2x128xf32>
    tpu.vector_store %arg7[%c0_292, %c3_293, %c0_294, %c0_295], %311 {strides = array<i32>} : memref<1x4x2x128xf32, #tpu.memory_space<vmem>>, vector<1x1x2x128xf32>,
    return
  }
  func.func @transform_0(%arg0: i32, %arg1: i32) -> (i32, i32) {
    %c0_i32 = arith.constant 0 : i32
    %c0_i32_0 = arith.constant 0 : i32
    %c0_i32_1 = arith.constant 0 : i32
    return %c0_i32, %c0_i32_0 : i32, i32
  }
  func.func @transform_1(%arg0: i32, %arg1: i32) -> (i32, i32) {
    %c0_i32 = arith.constant 0 : i32
    %c0_i32_0 = arith.constant 0 : i32
    %c0_i32_1 = arith.constant 0 : i32
    return %c0_i32, %c0_i32_0 : i32, i32
  }
  func.func @transform_2(%arg0: i32, %arg1: i32) -> (i32, i32, i32, i32) {
    %c0_i32 = arith.constant 0 : i32
    %c0_i32_0 = arith.constant 0 : i32
    %c0_i32_1 = arith.constant 0 : i32
    return %arg0, %c0_i32, %arg1, %c0_i32_0 : i32, i32, i32, i32
  }
  func.func @transform_3(%arg0: i32, %arg1: i32) -> (i32, i32, i32, i32) {
    %c0_i32 = arith.constant 0 : i32
    %c0_i32_0 = arith.constant 0 : i32
    %c0_i32_1 = arith.constant 0 : i32
    return %arg0, %c0_i32, %arg1, %c0_i32_0 : i32, i32, i32, i32
  }
  func.func @transform_4(%arg0: i32, %arg1: i32) -> (i32, i32, i32, i32) {
    %c0_i32 = arith.constant 0 : i32
    %c0_i32_0 = arith.constant 0 : i32
    %c0_i32_1 = arith.constant 0 : i32
    return %arg0, %c0_i32, %arg1, %c0_i32_0 : i32, i32, i32, i32
  }
  func.func @transform_5(%arg0: i32, %arg1: i32) -> (i32, i32, i32, i32) {
    %c0_i32 = arith.constant 0 : i32
    %c0_i32_0 = arith.constant 0 : i32
    %c0_i32_1 = arith.constant 0 : i32
    return %arg0, %c0_i32, %arg1, %c0_i32_0 : i32, i32, i32, i32
  }
}

</mosaic_0001>

<llo_original>
// kernel: tpu_custom_call.1
$region0: #{tpu_custom_call.1}
  #allocation0 [shape = 'u32[]', space=smem, size = 0x4, offset = 0x4, fixed_abs, tag = 'smem constant byte address 0x4 - core index']
  #allocation1 [shape = 'u32[144,128]{1,0:T(1,128)}', space=vmem, size = 0x12000, scoped, tag = 'internal scratch']
  %s0 = inlined_call_operand.hbm [shape: f32[4,12], index: 0, kind: input, shape index: {}]
  %s1 = inlined_call_operand.hbm [shape: f32[2,4], index: 1, kind: input, shape index: {}]
  %s2 = inlined_call_operand.hbm [shape: f32[2,4,2,128], index: 2, kind: input, shape index: {}]
  %s3 = inlined_call_operand.hbm [shape: f32[2,4,2,128], index: 3, kind: input, shape index: {}]
  %s4 = inlined_call_operand.hbm [shape: f32[2,4,2,128], index: 4, kind: input, shape index: {}]
  %s5 = inlined_call_operand.hbm [shape: f32[2,4,2,128], index: 5, kind: output, shape index: {}]
  %s6 = sld [smem:[#allocation0]]
  $region73: #{tpu_custom_call.1} parent=0
    _
  %s8 = ssub.s32 1, %s6
  %s9 = scalar_select 0, %s8, %s6
  $region1: #{tpu_custom_call.1} parent=0
    #allocation2 [shape = 'u8[2048]{0}', space=smem, size = 0x800, scoped, tag = 'input window, operand 0, single buffered']
    #allocation3 [shape = 's32[2]{0}', space=sflag, size = 0x8, scoped, tag = 'scoped memory for tpu_custom_call.1']
    #allocation4 [shape = 's32[2]{0}', space=sflag, size = 0x8, scoped, tag = 'scoped memory for tpu_custom_call.1']
    #allocation5 [shape = 's32[2]{0}', space=sflag, size = 0x8, scoped, tag = 'scoped memory for tpu_custom_call.1']
    #allocation6 [shape = 'u8[1024]{0}', space=smem, size = 0x400, scoped, tag = 'input window, operand 1, single buffered']
    #allocation7 [shape = 's32[1]{0}', space=sflag, size = 0x4, scoped, tag = 'scoped memory for tpu_custom_call.1']
    #allocation8 [shape = 'u8[8192]{0}', space=vmem, size = 0x2000, scoped, tag = 'input window, operand 2']
    #allocation9 [shape = 'u8[8192]{0}', space=vmem, size = 0x2000, scoped, tag = 'input window, operand 3']
    #allocation10 [shape = 's32[2]{0}', space=sflag, size = 0x8, scoped, tag = 'scoped memory for tpu_custom_call.1']
    #allocation11 [shape = 'u8[8192]{0}', space=vmem, size = 0x2000, scoped, tag = 'input window, operand 4']
    #allocation12 [shape = 'u8[8192]{0}', space=vmem, size = 0x2000, scoped, tag = 'output window, operand 0']
    %10 = vsyncpa [#allocation5], 0
    %11 = vsyncpa [#allocation7], 0
    %12 = vsyncpa [#allocation3], 0
    %s13 = scalar_lea.sflag [#allocation3], 1
    %14 = vsyncpa %s13, 0
    %15 = vsyncpa [#allocation10], 0
    %s16 = scalar_lea.sflag [#allocation10], 1
    %17 = vsyncpa %s16, 0
    %18 = vsyncpa [#allocation4], 0
    %s19 = scalar_lea.sflag [#allocation4], 1
    %20 = vsyncpa %s19, 0
    loop: start=0, step=1, limit=4
    $region2: #{tpu_custom_call.1} parent=1 // loop_pre_header
      _
    $region3: #{tpu_custom_call.1} parent=1 // loop_header
      %s22 = sphi 0, %s26
      %p23 = scmp.ge.s32.totalorder %s22, 4
      %s29 = sphi 0, %s41
      %s30 = sphi 0, %s37
      %s31 = sphi 0, %s29
      %s32 = sphi 0, %s30
      %s33 = sphi 0, %s31
      %s34 = sphi 0, %s32
      %s42 = sphi 0, %s42
      %s44 = sphi 0, %s42
      %s45 = sphi 0, %s44
      %s59 = sphi 0, %s45
      %s63 = sphi 0, %s63
      %s65 = sphi 0, %s63
      %s66 = sphi 0, %s65
      %s80 = sphi 0, %s66
      %s88 = sphi 0, %s90
      %s91 = sphi 0, %s88
      %s92 = sphi 0, %s91
      %s108 = sphi 0, %s92
      %s116 = sphi 0, %s118
      %s119 = sphi 0, %s116
      %s120 = sphi 0, %s119
      %s136 = sphi 0, %s120
      %s144 = sphi 0, %s146
      %s147 = sphi 0, %s144
      %s148 = sphi 0, %s147
      %s164 = sphi 0, %s148
      %s172 = sphi 0, %s174
      %s175 = sphi 0, %s172
      %s176 = sphi 0, %s175
      %s192 = sphi 0, %s176
    $region4: #{tpu_custom_call.1} parent=1 // loop_header_branch
      %25 = sbr.rel (%p23) target = $region8
    $region5: #{tpu_custom_call.1} parent=1 // loop_body
      %s27 = ssub.s32 %s22, 1
      %s28 = ssub.s32 %s22, 2
      %s35 = sadd.s32 1, %s30
      %p36 = scmp.ge.s32.totalorder %s35, 1
      %s37 = scalar_select %p36, 0, %s35
      %s38 = sadd.s32 1, %s29
      %s39 = scalar_select %p36, %s38, %s29
      %p40 = scmp.ge.s32.totalorder %s39, 2
      %s41 = scalar_select %p40, 0, %s39
      %s43 = sadd.s32 %s42, 1
      %p46 = scmp.eq.s32.totalorder %s22, 1
      %p47 = scmp.ne.s32.totalorder %s42, %s44
      %p48 = scmp.eq.s32.totalorder %s22, 0
      %p49 = por %p47, %p48
      %p50 = scmp.ne.s32.totalorder %s42, %s44
      %p51 = scmp.eq.s32.totalorder %s27, 1
      %p52 = por %p50, %p51
      %p53 = scmp.ne.s32.totalorder %s44, %s45
      %p54 = scmp.eq.s32.totalorder %s27, 0
      %p55 = por %p53, %p54
      %p56 = scmp.ne.s32.totalorder %s44, %s45
      %p57 = scmp.eq.s32.totalorder %s28, 1
      %p58 = por %p56, %p57
      %p60 = scmp.ne.s32.totalorder %s45, %s59
      %p61 = scmp.eq.s32.totalorder %s28, 0
      %p62 = por %p60, %p61
      %s64 = sadd.s32 %s63, 1
      %p67 = scmp.eq.s32.totalorder %s22, 1
      %p68 = scmp.ne.s32.totalorder %s63, %s65
      %p69 = scmp.eq.s32.totalorder %s22, 0
      %p70 = por %p68, %p69
      %p71 = scmp.ne.s32.totalorder %s63, %s65
      %p72 = scmp.eq.s32.totalorder %s27, 1
      %p73 = por %p71, %p72
      %p74 = scmp.ne.s32.totalorder %s65, %s66
      %p75 = scmp.eq.s32.totalorder %s27, 0
      %p76 = por %p74, %p75
      %p77 = scmp.ne.s32.totalorder %s65, %s66
      %p78 = scmp.eq.s32.totalorder %s28, 1
      %p79 = por %p77, %p78
      %p81 = scmp.ne.s32.totalorder %s66, %s80
      %p82 = scmp.eq.s32.totalorder %s28, 0
      %p83 = por %p81, %p82
      %s84 = ssub.s32 %s29, %s41
      %s85 = ssub.s32 %s30, %s37
      %s86 = sor.u32 %s84, %s85
      %p87 = scmp.eq.s32.totalorder %s86, 0
      %s89 = sadd.s32 %s88, 1
      %s90 = scalar_select %p87, %s88, %s89
      %p93 = pneg %p87
      %p94 = scmp.eq.s32.totalorder %s22, 1
      %p95 = por %p93, %p94
      %p96 = scmp.ne.s32.totalorder %s88, %s91
      %p97 = scmp.eq.s32.totalorder %s22, 0
      %p98 = por %p96, %p97
      %p99 = scmp.ne.s32.totalorder %s88, %s91
      %p100 = scmp.eq.s32.totalorder %s27, 1
      %p101 = por %p99, %p100
      %p102 = scmp.ne.s32.totalorder %s91, %s92
      %p103 = scmp.eq.s32.totalorder %s27, 0
      %p104 = por %p102, %p103
      %p105 = scmp.ne.s32.totalorder %s91, %s92
      %p106 = scmp.eq.s32.totalorder %s28, 1
      %p107 = por %p105, %p106
      %p109 = scmp.ne.s32.totalorder %s92, %s108
      %p110 = scmp.eq.s32.totalorder %s28, 0
      %p111 = por %p109, %p110
      %s112 = ssub.s32 %s29, %s41
      %s113 = ssub.s32 %s30, %s37
      %s114 = sor.u32 %s112, %s113
      %p115 = scmp.eq.s32.totalorder %s114, 0
      %s117 = sadd.s32 %s116, 1
      %s118 = scalar_select %p115, %s116, %s117
      %p121 = pneg %p115
      %p122 = scmp.eq.s32.totalorder %s22, 1
      %p123 = por %p121, %p122
      %p124 = scmp.ne.s32.totalorder %s116, %s119
      %p125 = scmp.eq.s32.totalorder %s22, 0
      %p126 = por %p124, %p125
      %p127 = scmp.ne.s32.totalorder %s116, %s119
      %p128 = scmp.eq.s32.totalorder %s27, 1
      %p129 = por %p127, %p128
      %p130 = scmp.ne.s32.totalorder %s119, %s120
      %p131 = scmp.eq.s32.totalorder %s27, 0
      %p132 = por %p130, %p131
      %p133 = scmp.ne.s32.totalorder %s119, %s120
      %p134 = scmp.eq.s32.totalorder %s28, 1
      %p135 = por %p133, %p134
      %p137 = scmp.ne.s32.totalorder %s120, %s136
      %p138 = scmp.eq.s32.totalorder %s28, 0
      %p139 = por %p137, %p138
      %s140 = ssub.s32 %s29, %s41
      %s141 = ssub.s32 %s30, %s37
      %s142 = sor.u32 %s140, %s141
      %p143 = scmp.eq.s32.totalorder %s142, 0
      %s145 = sadd.s32 %s144, 1
      %s146 = scalar_select %p143, %s144, %s145
      %p149 = pneg %p143
      %p150 = scmp.eq.s32.totalorder %s22, 1
      %p151 = por %p149, %p150
      %p152 = scmp.ne.s32.totalorder %s144, %s147
      %p153 = scmp.eq.s32.totalorder %s22, 0
      %p154 = por %p152, %p153
      %p155 = scmp.ne.s32.totalorder %s144, %s147
      %p156 = scmp.eq.s32.totalorder %s27, 1
      %p157 = por %p155, %p156
      %p158 = scmp.ne.s32.totalorder %s147, %s148
      %p159 = scmp.eq.s32.totalorder %s27, 0
      %p160 = por %p158, %p159
      %p161 = scmp.ne.s32.totalorder %s147, %s148
      %p162 = scmp.eq.s32.totalorder %s28, 1
      %p163 = por %p161, %p162
      %p165 = scmp.ne.s32.totalorder %s148, %s164
      %p166 = scmp.eq.s32.totalorder %s28, 0
      %p167 = por %p165, %p166
      %s168 = ssub.s32 %s29, %s41
      %s169 = ssub.s32 %s30, %s37
      %s170 = sor.u32 %s168, %s169
      %p171 = scmp.eq.s32.totalorder %s170, 0
      %s173 = sadd.s32 %s172, 1
      %s174 = scalar_select %p171, %s172, %s173
      %p177 = pneg %p171
      %p178 = scmp.eq.s32.totalorder %s22, 1
      %p179 = por %p177, %p178
      %p180 = scmp.ne.s32.totalorder %s172, %s175
      %p181 = scmp.eq.s32.totalorder %s22, 0
      %p182 = por %p180, %p181
      %p183 = scmp.ne.s32.totalorder %s172, %s175
      %p184 = scmp.eq.s32.totalorder %s27, 1
      %p185 = por %p183, %p184
      %p186 = scmp.ne.s32.totalorder %s175, %s176
      %p187 = scmp.eq.s32.totalorder %s27, 0
      %p188 = por %p186, %p187
      %p189 = scmp.ne.s32.totalorder %s175, %s176
      %p190 = scmp.eq.s32.totalorder %s28, 1
      %p191 = por %p189, %p190
      %p193 = scmp.ne.s32.totalorder %s176, %s192
      %p194 = scmp.eq.s32.totalorder %s28, 0
      %p195 = por %p193, %p194
      %p196 = scmp.le.s32.totalorder 1, %s22
      %p197 = scmp.lt.s32.totalorder %s22, 3
      %p198 = pnand %p196, %p197
      %p199 = pneg %p198
      // Predicated region
      $region9: #{tpu_custom_call.1} parent=5 // pred_check
        _
      $region10: #{tpu_custom_call.1} parent=5 // pred_check_branch
        %201 = sbr.rel (%p198) target = $region12
      $region11: #{tpu_custom_call.1} parent=5 // pred_region
        %s202 = ssub.s32 %s22, 1
        // Predicated region
        $region13: #{tpu_custom_call.1} parent=11 // pred_check
          %p203 = pneg %p55
        $region14: #{tpu_custom_call.1} parent=11 // pred_check_branch
          %205 = sbr.rel (%p203) target = $region16
        $region15: #{tpu_custom_call.1} parent=11 // pred_region
          %s207 = ssub.s32 64, 64
          %208 = vsyncadd [#allocation5], %s207
          %211 = dma.hbm_to_smem %s0, 64, [#allocation2], [#allocation5]
        $region16: #{tpu_custom_call.1} parent=11 // pred_fallthru
          _
        // Predicated region
        $region17: #{tpu_custom_call.1} parent=11 // pred_check
          %p212 = pneg %p76
        $region18: #{tpu_custom_call.1} parent=11 // pred_check_branch
          %214 = sbr.rel (%p212) target = $region20
        $region19: #{tpu_custom_call.1} parent=11 // pred_region
          %s216 = ssub.s32 32, 32
          %217 = vsyncadd [#allocation7], %s216
          %220 = dma.hbm_to_smem %s1, 32, [#allocation6], [#allocation7]
        $region20: #{tpu_custom_call.1} parent=11 // pred_fallthru
          _
      $region12: #{tpu_custom_call.1} parent=5 // pred_fallthru
        _
      %p221 = scmp.lt.s32.totalorder %s22, 2
      // Predicated region
      $region21: #{tpu_custom_call.1} parent=5 // pred_check
        %p222 = pneg %p221
      $region22: #{tpu_custom_call.1} parent=5 // pred_check_branch
        %224 = sbr.rel (%p222) target = $region24
      $region23: #{tpu_custom_call.1} parent=5 // pred_region
        // Predicated region
        $region25: #{tpu_custom_call.1} parent=23 // pred_check
          %p225 = pneg %p98
        $region26: #{tpu_custom_call.1} parent=23 // pred_check_branch
          %227 = sbr.rel (%p225) target = $region28
        $region27: #{tpu_custom_call.1} parent=23 // pred_region
          %s228 = sand.u32 %s88, 1
          %s229 = scalar_lea.sflag [#allocation3], %s228
          %s230 = sand.u32 %s88, 1
          %s231 = smul.addr %s230, 8
          %s232 = scalar_lea.vmem [#allocation8], %s231
          %s234 = ssub.s32 128, 128
          %235 = vsyncadd %s229, %s234
          %s236 = smul.addr %s29, 4
          %s237 = sadd.s32 %s30, %s236
          %s238 = smul.addr %s237, 32
          %s239 = scalar_lea.hbm %s2, %s238
          %s240 = sshll.u32 %s232, 4
          %s241 = int_to_ptr.vmem [resolvable:$true] %s240
          %246 = dma.hbm_to_vmem [thread:$0]  %s239, 128, %s241, %s229, 32, 32, 2
        $region28: #{tpu_custom_call.1} parent=23 // pred_fallthru
          _
        // Predicated region
        $region29: #{tpu_custom_call.1} parent=23 // pred_check
          %p247 = pneg %p126
        $region30: #{tpu_custom_call.1} parent=23 // pred_check_branch
          %249 = sbr.rel (%p247) target = $region32
        $region31: #{tpu_custom_call.1} parent=23 // pred_region
          %s250 = sand.u32 %s22, 1
          %s251 = scalar_lea.sflag [#allocation10], %s250
          %s252 = sand.u32 %s116, 1
          %s253 = smul.addr %s252, 8
          %s254 = scalar_lea.vmem [#allocation9], %s253
          %s256 = ssub.s32 128, 128
          %257 = vsyncadd %s251, %s256
          %s258 = smul.addr %s29, 4
          %s259 = sadd.s32 %s30, %s258
          %s260 = smul.addr %s259, 32
          %s261 = scalar_lea.hbm %s3, %s260
          %s262 = sshll.u32 %s254, 4
          %s263 = int_to_ptr.vmem [resolvable:$true] %s262
          %268 = dma.hbm_to_vmem [thread:$0]  %s261, 128, %s263, %s251, 32, 32, 2
        $region32: #{tpu_custom_call.1} parent=23 // pred_fallthru
          _
        // Predicated region
        $region33: #{tpu_custom_call.1} parent=23 // pred_check
          %p269 = pneg %p154
        $region34: #{tpu_custom_call.1} parent=23 // pred_check_branch
          %271 = sbr.rel (%p269) target = $region36
        $region35: #{tpu_custom_call.1} parent=23 // pred_region
          %s272 = sand.u32 %s22, 1
          %s273 = scalar_lea.sflag [#allocation10], %s272
          %s274 = sand.u32 %s144, 1
          %s275 = smul.addr %s274, 8
          %s276 = scalar_lea.vmem [#allocation11], %s275
          %s278 = ssub.s32 128, 128
          %279 = vsyncadd %s273, %s278
          %s280 = smul.addr %s29, 4
          %s281 = sadd.s32 %s30, %s280
          %s282 = smul.addr %s281, 32
          %s283 = scalar_lea.hbm %s4, %s282
          %s284 = sshll.u32 %s276, 4
          %s285 = int_to_ptr.vmem [resolvable:$true] %s284
          %290 = dma.hbm_to_vmem [thread:$0]  %s283, 128, %s285, %s273, 32, 32, 2
        $region36: #{tpu_custom_call.1} parent=23 // pred_fallthru
          _
      $region24: #{tpu_custom_call.1} parent=5 // pred_fallthru
        _
      %p291 = scmp.le.s32.totalorder 1, %s22
      %p292 = scmp.lt.s32.totalorder %s22, 3
      %p293 = pnand %p291, %p292
      %p294 = pneg %p293
      // Predicated region
      $region37: #{tpu_custom_call.1} parent=5 // pred_check
        _
      $region38: #{tpu_custom_call.1} parent=5 // pred_check_branch
        %296 = sbr.rel (%p293) target = $region40
      $region39: #{tpu_custom_call.1} parent=5 // pred_region
        %s297 = ssub.s32 %s22, 1
        // Predicated region
        $region41: #{tpu_custom_call.1} parent=39 // pred_check
          %p298 = pneg %p55
        $region42: #{tpu_custom_call.1} parent=39 // pred_check_branch
          %300 = sbr.rel (%p298) target = $region44
        $region43: #{tpu_custom_call.1} parent=39 // pred_region
          %301 = dma.done [#allocation5], 64
        $region44: #{tpu_custom_call.1} parent=39 // pred_fallthru
          _
        // Predicated region
        $region45: #{tpu_custom_call.1} parent=39 // pred_check
          %p302 = pneg %p76
        $region46: #{tpu_custom_call.1} parent=39 // pred_check_branch
          %304 = sbr.rel (%p302) target = $region48
        $region47: #{tpu_custom_call.1} parent=39 // pred_region
          %305 = dma.done [#allocation7], 32
        $region48: #{tpu_custom_call.1} parent=39 // pred_fallthru
          _
        %s306 = sand.u32 %s91, 1
        %s307 = scalar_lea.sflag [#allocation3], %s306
        %s308 = sand.u32 %s91, 1
        %s309 = smul.addr %s308, 8
        %s310 = scalar_lea.vmem [#allocation8], %s309
        // Predicated region
        $region49: #{tpu_custom_call.1} parent=39 // pred_check
          %p311 = pneg %p104
        $region50: #{tpu_custom_call.1} parent=39 // pred_check_branch
          %313 = sbr.rel (%p311) target = $region52
        $region51: #{tpu_custom_call.1} parent=39 // pred_region
          %314 = dma.done %s307, 128
        $region52: #{tpu_custom_call.1} parent=39 // pred_fallthru
          _
        %s315 = sand.u32 %s27, 1
        %s316 = scalar_lea.sflag [#allocation10], %s315
        %s317 = sand.u32 %s119, 1
        %s318 = smul.addr %s317, 8
        %s319 = scalar_lea.vmem [#allocation9], %s318
        // Predicated region
        $region53: #{tpu_custom_call.1} parent=39 // pred_check
          %p320 = pneg %p132
        $region54: #{tpu_custom_call.1} parent=39 // pred_check_branch
          %322 = sbr.rel (%p320) target = $region56
        $region55: #{tpu_custom_call.1} parent=39 // pred_region
          %323 = dma.done %s316, 128
        $region56: #{tpu_custom_call.1} parent=39 // pred_fallthru
          _
        %s324 = sand.u32 %s27, 1
        %s325 = scalar_lea.sflag [#allocation10], %s324
        %s326 = sand.u32 %s147, 1
        %s327 = smul.addr %s326, 8
        %s328 = scalar_lea.vmem [#allocation11], %s327
        // Predicated region
        $region57: #{tpu_custom_call.1} parent=39 // pred_check
          %p329 = pneg %p160
        $region58: #{tpu_custom_call.1} parent=39 // pred_check_branch
          %331 = sbr.rel (%p329) target = $region60
        $region59: #{tpu_custom_call.1} parent=39 // pred_region
          %332 = dma.done %s325, 128
        $region60: #{tpu_custom_call.1} parent=39 // pred_fallthru
          _
        %333 = sfence
        %p334 = pneg %p55
        %p335 = pneg %p52
        %p336 = pneg %p76
        %p337 = pneg %p73
        %s338 = sand.u32 %s91, 1
        %s339 = scalar_lea.sflag [#allocation3], %s338
        %s340 = sand.u32 %s91, 1
        %s341 = smul.addr %s340, 8
        %s342 = scalar_lea.vmem [#allocation8], %s341
        %p343 = pneg %p104
        %p344 = pneg %p101
        %s345 = sand.u32 %s27, 1
        %s346 = scalar_lea.sflag [#allocation10], %s345
        %s347 = sand.u32 %s119, 1
        %s348 = smul.addr %s347, 8
        %s349 = scalar_lea.vmem [#allocation9], %s348
        %p350 = pneg %p132
        %p351 = pneg %p129
        %s352 = sand.u32 %s27, 1
        %s353 = scalar_lea.sflag [#allocation10], %s352
        %s354 = sand.u32 %s147, 1
        %s355 = smul.addr %s354, 8
        %s356 = scalar_lea.vmem [#allocation11], %s355
        %p357 = pneg %p160
        %p358 = pneg %p157
        %p359 = pneg %p188
        %p360 = pneg %p185
        %s361 = sand.u32 %s175, 1
        %s362 = scalar_lea.sflag [#allocation4], %s361
        %s363 = sand.u32 %s175, 1
        %s364 = smul.addr %s363, 8
        %s365 = scalar_lea.vmem [#allocation12], %s364
        %v366 = vld [vmem:[%s310] sm:$0x3]
        %s367 = sld [smem:[#allocation2]]
        %v368 = vstv %s367
        %v369 = vmul.f32 %v366, %v368
        %s370 = scalar_lea.vmem %s310, 2 [#allocation8]
        %v371 = vld [vmem:[%s370] sm:$0x3]
        %s372 = sld [smem:[#allocation2 + $0x1]]
        %v373 = vstv %s372
        %v374 = vmul.f32 %v371, %v373
        %v375 = vadd.f32 %v369, %v374
        %s376 = scalar_lea.vmem %s310, 4 [#allocation8]
        %v377 = vld [vmem:[%s376] sm:$0x3]
        %s378 = sld [smem:[#allocation2 + $0x2]]
        %v379 = vstv %s378
        %v380 = vmul.f32 %v377, %v379
        %v381 = vadd.f32 %v375, %v380
        %s382 = scalar_lea.vmem %s310, 6 [#allocation8]
        %v383 = vld [vmem:[%s382] sm:$0x3]
        %s384 = sld [smem:[#allocation2 + $0x3]]
        %v385 = vstv %s384
        %v386 = vmul.f32 %v383, %v385
        %v387 = vadd.f32 %v381, %v386
        %v388 = vld [vmem:[%s319] sm:$0x3]
        %s389 = sld [smem:[#allocation2 + $0x4]]
        %v390 = vstv %s389
        %v391 = vmul.f32 %v388, %v390
        %v392 = vadd.f32 %v387, %v391
        %s393 = scalar_lea.vmem %s319, 2 [#allocation9]
        %v394 = vld [vmem:[%s393] sm:$0x3]
        %s395 = sld [smem:[#allocation2 + $0x5]]
        %v396 = vstv %s395
        %v397 = vmul.f32 %v394, %v396
        %v398 = vadd.f32 %v392, %v397
        %s399 = scalar_lea.vmem %s319, 4 [#allocation9]
        %v400 = vld [vmem:[%s399] sm:$0x3]
        %s401 = sld [smem:[#allocation2 + $0x6]]
        %v402 = vstv %s401
        %v403 = vmul.f32 %v400, %v402
        %v404 = vadd.f32 %v398, %v403
        %s405 = scalar_lea.vmem %s319, 6 [#allocation9]
        %v406 = vld [vmem:[%s405] sm:$0x3]
        %s407 = sld [smem:[#allocation2 + $0x7]]
        %v408 = vstv %s407
        %v409 = vmul.f32 %v406, %v408
        %v410 = vadd.f32 %v404, %v409
        %v411 = vld [vmem:[%s328] sm:$0x3]
        %s412 = sld [smem:[#allocation2 + $0x8]]
        %v413 = vstv %s412
        %v414 = vmul.f32 %v411, %v413
        %v415 = vadd.f32 %v410, %v414
        %s416 = scalar_lea.vmem %s328, 2 [#allocation11]
        %v417 = vld [vmem:[%s416] sm:$0x3]
        %s418 = sld [smem:[#allocation2 + $0x9]]
        %v419 = vstv %s418
        %v420 = vmul.f32 %v417, %v419
        %v421 = vadd.f32 %v415, %v420
        %s422 = scalar_lea.vmem %s328, 4 [#allocation11]
        %v423 = vld [vmem:[%s422] sm:$0x3]
        %s424 = sld [smem:[#allocation2 + $0xa]]
        %v425 = vstv %s424
        %v426 = vmul.f32 %v423, %v425
        %v427 = vadd.f32 %v421, %v426
        %s428 = scalar_lea.vmem %s328, 6 [#allocation11]
        %v429 = vld [vmem:[%s428] sm:$0x3]
        %s430 = sld [smem:[#allocation2 + $0xb]]
        %v431 = vstv %s430
        %v432 = vmul.f32 %v429, %v431
        %v433 = vadd.f32 %v427, %v432
        %s434 = smul.u32 %s31, 128
        %s435 = sld [smem:[#allocation6 + %s434]]
        %v436 = vstv %s435
        %v437 = vadd.f32 %v433, %v436
        %438 = vst [vmem:[%s365] sm:$0x3] %v437
        %v439 = vld [vmem:[%s310] sm:$0x3]
        %s440 = sld [smem:[#allocation2 + $0x80]]
        %v441 = vstv %s440
        %v442 = vmul.f32 %v439, %v441
        %v443 = vld [vmem:[%s370] sm:$0x3]
        %s444 = sld [smem:[#allocation2 + $0x81]]
        %v445 = vstv %s444
        %v446 = vmul.f32 %v443, %v445
        %v447 = vadd.f32 %v442, %v446
        %v448 = vld [vmem:[%s376] sm:$0x3]
        %s449 = sld [smem:[#allocation2 + $0x82]]
        %v450 = vstv %s449
        %v451 = vmul.f32 %v448, %v450
        %v452 = vadd.f32 %v447, %v451
        %v453 = vld [vmem:[%s382] sm:$0x3]
        %s454 = sld [smem:[#allocation2 + $0x83]]
        %v455 = vstv %s454
        %v456 = vmul.f32 %v453, %v455
        %v457 = vadd.f32 %v452, %v456
        %v458 = vld [vmem:[%s319] sm:$0x3]
        %s459 = sld [smem:[#allocation2 + $0x84]]
        %v460 = vstv %s459
        %v461 = vmul.f32 %v458, %v460
        %v462 = vadd.f32 %v457, %v461
        %v463 = vld [vmem:[%s393] sm:$0x3]
        %s464 = sld [smem:[#allocation2 + $0x85]]
        %v465 = vstv %s464
        %v466 = vmul.f32 %v463, %v465
        %v467 = vadd.f32 %v462, %v466
        %v468 = vld [vmem:[%s399] sm:$0x3]
        %s469 = sld [smem:[#allocation2 + $0x86]]
        %v470 = vstv %s469
        %v471 = vmul.f32 %v468, %v470
        %v472 = vadd.f32 %v467, %v471
        %v473 = vld [vmem:[%s405] sm:$0x3]
        %s474 = sld [smem:[#allocation2 + $0x87]]
        %v475 = vstv %s474
        %v476 = vmul.f32 %v473, %v475
        %v477 = vadd.f32 %v472, %v476
        %v478 = vld [vmem:[%s328] sm:$0x3]
        %s479 = sld [smem:[#allocation2 + $0x88]]
        %v480 = vstv %s479
        %v481 = vmul.f32 %v478, %v480
        %v482 = vadd.f32 %v477, %v481
        %v483 = vld [vmem:[%s416] sm:$0x3]
        %s484 = sld [smem:[#allocation2 + $0x89]]
        %v485 = vstv %s484
        %v486 = vmul.f32 %v483, %v485
        %v487 = vadd.f32 %v482, %v486
        %v488 = vld [vmem:[%s422] sm:$0x3]
        %s489 = sld [smem:[#allocation2 + $0x8a]]
        %v490 = vstv %s489
        %v491 = vmul.f32 %v488, %v490
        %v492 = vadd.f32 %v487, %v491
        %v493 = vld [vmem:[%s428] sm:$0x3]
        %s494 = sld [smem:[#allocation2 + $0x8b]]
        %v495 = vstv %s494
        %v496 = vmul.f32 %v493, %v495
        %v497 = vadd.f32 %v492, %v496
        %s498 = sadd.s32 %s434, 1
        %s499 = sld [smem:[#allocation6 + %s498]]
        %v500 = vstv %s499
        %v501 = vadd.f32 %v497, %v500
        %s502 = scalar_lea.vmem %s365, 2 [#allocation12]
        %503 = vst [vmem:[%s502] sm:$0x3] %v501
        %v504 = vld [vmem:[%s310] sm:$0x3]
        %s505 = sld [smem:[#allocation2 + $0x100]]
        %v506 = vstv %s505
        %v507 = vmul.f32 %v504, %v506
        %v508 = vld [vmem:[%s370] sm:$0x3]
        %s509 = sld [smem:[#allocation2 + $0x101]]
        %v510 = vstv %s509
        %v511 = vmul.f32 %v508, %v510
        %v512 = vadd.f32 %v507, %v511
        %v513 = vld [vmem:[%s376] sm:$0x3]
        %s514 = sld [smem:[#allocation2 + $0x102]]
        %v515 = vstv %s514
        %v516 = vmul.f32 %v513, %v515
        %v517 = vadd.f32 %v512, %v516
        %v518 = vld [vmem:[%s382] sm:$0x3]
        %s519 = sld [smem:[#allocation2 + $0x103]]
        %v520 = vstv %s519
        %v521 = vmul.f32 %v518, %v520
        %v522 = vadd.f32 %v517, %v521
        %v523 = vld [vmem:[%s319] sm:$0x3]
        %s524 = sld [smem:[#allocation2 + $0x104]]
        %v525 = vstv %s524
        %v526 = vmul.f32 %v523, %v525
        %v527 = vadd.f32 %v522, %v526
        %v528 = vld [vmem:[%s393] sm:$0x3]
        %s529 = sld [smem:[#allocation2 + $0x105]]
        %v530 = vstv %s529
        %v531 = vmul.f32 %v528, %v530
        %v532 = vadd.f32 %v527, %v531
        %v533 = vld [vmem:[%s399] sm:$0x3]
        %s534 = sld [smem:[#allocation2 + $0x106]]
        %v535 = vstv %s534
        %v536 = vmul.f32 %v533, %v535
        %v537 = vadd.f32 %v532, %v536
        %v538 = vld [vmem:[%s405] sm:$0x3]
        %s539 = sld [smem:[#allocation2 + $0x107]]
        %v540 = vstv %s539
        %v541 = vmul.f32 %v538, %v540
        %v542 = vadd.f32 %v537, %v541
        %v543 = vld [vmem:[%s328] sm:$0x3]
        %s544 = sld [smem:[#allocation2 + $0x108]]
        %v545 = vstv %s544
        %v546 = vmul.f32 %v543, %v545
        %v547 = vadd.f32 %v542, %v546
        %v548 = vld [vmem:[%s416] sm:$0x3]
        %s549 = sld [smem:[#allocation2 + $0x109]]
        %v550 = vstv %s549
        %v551 = vmul.f32 %v548, %v550
        %v552 = vadd.f32 %v547, %v551
        %v553 = vld [vmem:[%s422] sm:$0x3]
        %s554 = sld [smem:[#allocation2 + $0x10a]]
        %v555 = vstv %s554
        %v556 = vmul.f32 %v553, %v555
        %v557 = vadd.f32 %v552, %v556
        %v558 = vld [vmem:[%s428] sm:$0x3]
        %s559 = sld [smem:[#allocation2 + $0x10b]]
        %v560 = vstv %s559
        %v561 = vmul.f32 %v558, %v560
        %v562 = vadd.f32 %v557, %v561
        %s563 = sadd.s32 %s434, 2
        %s564 = sld [smem:[#allocation6 + %s563]]
        %v565 = vstv %s564
        %v566 = vadd.f32 %v562, %v565
        %s567 = scalar_lea.vmem %s365, 4 [#allocation12]
        %568 = vst [vmem:[%s567] sm:$0x3] %v566
        %v569 = vld [vmem:[%s310] sm:$0x3]
        %s570 = sld [smem:[#allocation2 + $0x180]]
        %v571 = vstv %s570
        %v572 = vmul.f32 %v569, %v571
        %v573 = vld [vmem:[%s370] sm:$0x3]
        %s574 = sld [smem:[#allocation2 + $0x181]]
        %v575 = vstv %s574
        %v576 = vmul.f32 %v573, %v575
        %v577 = vadd.f32 %v572, %v576
        %v578 = vld [vmem:[%s376] sm:$0x3]
        %s579 = sld [smem:[#allocation2 + $0x182]]
        %v580 = vstv %s579
        %v581 = vmul.f32 %v578, %v580
        %v582 = vadd.f32 %v577, %v581
        %v583 = vld [vmem:[%s382] sm:$0x3]
        %s584 = sld [smem:[#allocation2 + $0x183]]
        %v585 = vstv %s584
        %v586 = vmul.f32 %v583, %v585
        %v587 = vadd.f32 %v582, %v586
        %v588 = vld [vmem:[%s319] sm:$0x3]
        %s589 = sld [smem:[#allocation2 + $0x184]]
        %v590 = vstv %s589
        %v591 = vmul.f32 %v588, %v590
        %v592 = vadd.f32 %v587, %v591
        %v593 = vld [vmem:[%s393] sm:$0x3]
        %s594 = sld [smem:[#allocation2 + $0x185]]
        %v595 = vstv %s594
        %v596 = vmul.f32 %v593, %v595
        %v597 = vadd.f32 %v592, %v596
        %v598 = vld [vmem:[%s399] sm:$0x3]
        %s599 = sld [smem:[#allocation2 + $0x186]]
        %v600 = vstv %s599
        %v601 = vmul.f32 %v598, %v600
        %v602 = vadd.f32 %v597, %v601
        %v603 = vld [vmem:[%s405] sm:$0x3]
        %s604 = sld [smem:[#allocation2 + $0x187]]
        %v605 = vstv %s604
        %v606 = vmul.f32 %v603, %v605
        %v607 = vadd.f32 %v602, %v606
        %v608 = vld [vmem:[%s328] sm:$0x3]
        %s609 = sld [smem:[#allocation2 + $0x188]]
        %v610 = vstv %s609
        %v611 = vmul.f32 %v608, %v610
        %v612 = vadd.f32 %v607, %v611
        %v613 = vld [vmem:[%s416] sm:$0x3]
        %s614 = sld [smem:[#allocation2 + $0x189]]
        %v615 = vstv %s614
        %v616 = vmul.f32 %v613, %v615
        %v617 = vadd.f32 %v612, %v616
        %v618 = vld [vmem:[%s422] sm:$0x3]
        %s619 = sld [smem:[#allocation2 + $0x18a]]
        %v620 = vstv %s619
        %v621 = vmul.f32 %v618, %v620
        %v622 = vadd.f32 %v617, %v621
        %v623 = vld [vmem:[%s428] sm:$0x3]
        %s624 = sld [smem:[#allocation2 + $0x18b]]
        %v625 = vstv %s624
        %v626 = vmul.f32 %v623, %v625
        %v627 = vadd.f32 %v622, %v626
        %s628 = sadd.s32 %s434, 3
        %s629 = sld [smem:[#allocation6 + %s628]]
        %v630 = vstv %s629
        %v631 = vadd.f32 %v627, %v630
        %s632 = scalar_lea.vmem %s365, 6 [#allocation12]
        %633 = vst [vmem:[%s632] sm:$0x3] %v631
        %s634 = sand.u32 %s175, 1
        %s635 = scalar_lea.sflag [#allocation4], %s634
        %s636 = sand.u32 %s175, 1
        %s637 = smul.addr %s636, 8
        %s638 = scalar_lea.vmem [#allocation12], %s637
        // Predicated region
        $region61: #{tpu_custom_call.1} parent=39 // pred_check
          %p639 = pneg %p185
        $region62: #{tpu_custom_call.1} parent=39 // pred_check_branch
          %641 = sbr.rel (%p639) target = $region64
        $region63: #{tpu_custom_call.1} parent=39 // pred_region
          %s643 = ssub.s32 128, 128
          %644 = vsyncadd %s635, %s643
          %s645 = smul.addr %s31, 4
          %s646 = sadd.s32 %s32, %s645
          %s647 = smul.addr %s646, 32
          %s648 = scalar_lea.hbm %s5, %s647
          %s649 = sshll.u32 %s638, 4
          %s650 = int_to_ptr.vmem [resolvable:$true] %s649
          %655 = dma.vmem_to_hbm [thread:$0]  %s650, 128, %s648, %s635, 32, 32, 2
        $region64: #{tpu_custom_call.1} parent=39 // pred_fallthru
          _
      $region40: #{tpu_custom_call.1} parent=5 // pred_fallthru
        _
      %p656 = scmp.le.s32.totalorder 2, %s22
      // Predicated region
      $region65: #{tpu_custom_call.1} parent=5 // pred_check
        %p657 = pneg %p656
      $region66: #{tpu_custom_call.1} parent=5 // pred_check_branch
        %659 = sbr.rel (%p657) target = $region68
      $region67: #{tpu_custom_call.1} parent=5 // pred_region
        %s660 = ssub.s32 %s22, 2
        // Predicated region
        $region69: #{tpu_custom_call.1} parent=67 // pred_check
          %p661 = pneg %p191
        $region70: #{tpu_custom_call.1} parent=67 // pred_check_branch
          %663 = sbr.rel (%p661) target = $region72
        $region71: #{tpu_custom_call.1} parent=67 // pred_region
          %s664 = sand.u32 %s176, 1
          %s665 = scalar_lea.sflag [#allocation4], %s664
          %s666 = sand.u32 %s176, 1
          %s667 = smul.addr %s666, 8
          %s668 = scalar_lea.vmem [#allocation12], %s667
          %669 = dma.done %s665, 128
        $region72: #{tpu_custom_call.1} parent=67 // pred_fallthru
          _
      $region68: #{tpu_custom_call.1} parent=5 // pred_fallthru
        _
    $region6: #{tpu_custom_call.1} parent=1 // loop_footer
      %s26 = sadd.s32 1, %s22
    $region7: #{tpu_custom_call.1} parent=1 // loop_footer_branch
      %21 = sbr.rel target = $region3
    $region8: #{tpu_custom_call.1} parent=1 // loop_exit
      _
    %670 = vsyncpa [#allocation3], 1
    %s671 = scalar_lea.sflag [#allocation3], 1
    %672 = vsyncpa %s671, 1
    %673 = vsyncpa [#allocation10], 1
    %s674 = scalar_lea.sflag [#allocation10], 1
    %675 = vsyncpa %s674, 1
    %676 = vsyncpa [#allocation4], 1
    %s677 = scalar_lea.sflag [#allocation4], 1
    %678 = vsyncpa %s677, 1
    %679 = vsyncpa [#allocation5], 1
    %s680 = scalar_lea.sflag [#allocation5], 1
    %681 = vsyncpa %s680, 1
    %682 = vsyncpa [#allocation7], 1

</llo_original>
